<compile_context>
chip_gen: v7x
topology: tpu7x:2x2x1
jax: 0.10.0
libtpu: 0.0.40
codegen_flags: <defaults>
</compile_context>

<pallas_src>
import functools

import jax
import jax.numpy as jnp
import numpy as np
from jax.experimental import pallas as pl
from jax.experimental.pallas import tpu as pltpu


_VMEM_LIMIT_BYTES = 48 * 1024 * 1024      # explicit scoped-VMEM limit (all gens)
_CHUNK_VMEM_BUDGET = 20 * 1024 * 1024     # target live bytes per grid step


# --------------------------------------------------------------------------- #
# Fused Pallas kernel: whole CNN forward for one batch-chunk
# --------------------------------------------------------------------------- #
def _fused_cnn_kernel(x_ref, *rest, K, L, convs_per_block, n_blocks_to_run, cins):
    o_ref = rest[-1]
    w_refs = rest[:-1]               # per conv: (W_stack (K*Cin, Cout), bias (1, Cout))
    pad = K // 2
    M = x_ref.shape[0]               # rows in this chunk = batch_tile * L
    offsets = tuple(k - pad for k in range(K) if k != pad)

    # ---- prologue: boundary masks built ONCE, reused by every conv layer ----
    # position of each row within its own sequence (batches never mix: rolled
    # rows that cross a sequence boundary are exactly the masked rows).
    l_pos = jax.lax.broadcasted_iota(jnp.int32, (M, 1), 0) % L
    masks = {}                       # (shift, cin) -> (M, cin) f32 multiplicative mask
    for cin in cins:
        for s in offsets:
            valid = (l_pos >= -s) if s < 0 else (l_pos < (L - s))
            masks[(s, cin)] = jnp.broadcast_to(valid.astype(jnp.float32), (M, cin))

    h = x_ref[...].astype(jnp.float32)       # (M, Cin0)

    # NOTE: block x conv x tap loops are Python-unrolled (4 convs here). For
    # much larger configs, move the block loop onto a grid axis / fori_loop
    # with a VMEM-carried accumulator to bound live ranges.
    widx = 0
    for blk in range(n_blocks_to_run):
        is_residual = blk != 0
        block_in = h
        for cv in range(convs_per_block):
            w_stack = w_refs[widx][...]      # (K*cin, Cout)  matmul dtype (bf16/f32)
            bias = w_refs[widx + 1][...]     # (1, Cout)      f32 (= bdw@wpw + bpw)
            widx += 2
            cin = h.shape[-1]

            # -- im2col slab: K rolled (XLU) + masked (1 vmul) copies, lanes --
            pieces = []
            for k in range(K):
                s = k - pad
                if s == 0:
                    pieces.append(h)                                   # center tap
                else:
                    shifted = pltpu.roll(h, shift=(-s) % M, axis=0)    # XLU slot
                    pieces.append(shifted * masks[(s, cin)])           # zero "same" pad
            slab = jnp.concatenate(pieces, axis=-1)                    # (M, K*cin) f32

            # -- depthwise + pointwise fused into ONE MXU matmul (f32 accum) --
            y = jnp.dot(slab.astype(w_stack.dtype), w_stack,
                        preferred_element_type=jnp.float32) + bias

            if cv == convs_per_block - 1 and is_residual:
                y = y + block_in
            h = jnp.maximum(y, 0.0)          # inner ReLUs + block activation fused

    o_ref[...] = h.astype(o_ref.dtype)


# --------------------------------------------------------------------------- #
# VMEM-aware batch_tile selection
# --------------------------------------------------------------------------- #
def _vmem_chunk_bytes(Mc, Cin0, Cout, K, mm_itemsize):
    Cmax = max(Cin0, Cout)
    io = 2 * Mc * (Cin0 + Cout) * 4                 # double-buffered in/out blocks
    hoisted_masks = (K - 1) * Mc * (Cin0 + Cout) * 4
    slab = Mc * K * Cin0 * (4 + mm_itemsize)        # f32 pieces + cast matmul LHS
    live_acts = 4 * Mc * Cmax * 4                   # h, block_in, y, temps
    return io + hoisted_masks + slab + live_acts


def _choose_batch_tile(B, L, Cin0, Cout, K, mm_itemsize, budget):
    cands = [bt for bt in range(B, 0, -1)
             if B % bt == 0 and (B // bt == 1 or (bt * L) % 8 == 0)]
    fitting = [bt for bt in cands
               if _vmem_chunk_bytes(bt * L, Cin0, Cout, K, mm_itemsize) <= budget]
    if not fitting:
        fitting = [cands[-1]]                       # smallest aligned tile
    # Prefer >=2 chunks so the "parallel" grid axis shards across v7x's 2 TCs,
    # but keep the tile as large as possible to amortize per-step overhead.
    multi = [bt for bt in fitting if B // bt >= 2]
    return max(multi) if multi else max(fitting)


# --------------------------------------------------------------------------- #
# Wrapper: one pallas_call for the full forward
# --------------------------------------------------------------------------- #
def off_the_grid_convcnp_cnn(x, params, layer_id=-1, *, batch_tile=None,
                             matmul_dtype=jnp.bfloat16):
    """x: (B, L, Cin0) channel-last.  params: list[block] of list[(wdw,bdw,wpw,bpw)].

    Returns layers[layer_id] with shape (B, L, num_filters)."""
    B, L, Cin0 = x.shape
    n_blocks = len(params)
    convs_per_block = len(params[0])
    target = layer_id % n_blocks              # which block's output to return
    n_run = target + 1                        # blocks needed
    K = params[0][0][0].shape[0]
    Cout = params[0][0][2].shape[1]
    assert K % 2 == 1, "'same'-padding depthwise conv assumes an odd kernel_size"

    mm_itemsize = jnp.dtype(matmul_dtype).itemsize
    if batch_tile is None:
        batch_tile = _choose_batch_tile(B, L, Cin0, Cout, K, mm_itemsize,
                                        _CHUNK_VMEM_BUDGET)
    assert B % batch_tile == 0
    n_chunks = B // batch_tile
    Mc = batch_tile * L
    if n_chunks > 1:
        assert Mc % 8 == 0, "(batch_tile * L) must be a multiple of 8 when tiled"

    # Fold depthwise taps + both biases into the pointwise weights:
    #   out = sum_k shift_k(x) @ (wdw[k,:,None] * wpw)  +  (bdw @ wpw + bpw)
    flat_w, cins = [], []
    flops = 0
    bytes_accessed = B * L * (Cin0 + Cout) * 4
    for blk in params[:n_run]:
        for (wdw, bdw, wpw, bpw) in blk:
            k_, cin = wdw.shape
            co = wpw.shape[1]
            w_stack = (wdw[:, :, None] * wpw[None, :, :]).reshape(k_ * cin, co)
            bias = (bdw @ wpw + bpw).astype(jnp.float32)               # (1, Cout)
            flat_w += [w_stack.astype(matmul_dtype), bias]
            cins.append(cin)
            flops += 2 * B * L * k_ * cin * co + 3 * (k_ - 1) * B * L * cin
            bytes_accessed += w_stack.size * mm_itemsize + bias.size * 4
    cins_static = tuple(sorted(set(cins)))

    x2d = x.reshape(B * L, Cin0)

    kernel = functools.partial(_fused_cnn_kernel, K=K, L=L,
                               convs_per_block=convs_per_block,
                               n_blocks_to_run=n_run, cins=cins_static)

    in_specs = [pl.BlockSpec((Mc, Cin0), lambda c: (c, 0))]            # activations
    for w in flat_w:                                                   # weights (chunk-invariant)
        in_specs.append(pl.BlockSpec(w.shape, lambda c: (0, 0)))

    out2d = pl.pallas_call(
        kernel,
        out_shape=jax.ShapeDtypeStruct((B * L, Cout), x.dtype),
        grid=(n_chunks,),
        in_specs=in_specs,
        out_specs=pl.BlockSpec((Mc, Cout), lambda c: (c, 0)),
        compiler_params=pltpu.CompilerParams(
            dimension_semantics=("parallel",),
            vmem_limit_bytes=_VMEM_LIMIT_BYTES),
        cost_estimate=pl.CostEstimate(flops=flops, transcendentals=0,
                                      bytes_accessed=bytes_accessed),
    )(x2d, *flat_w)

    return out2d.reshape(B, L, Cout)


# --------------------------------------------------------------------------- #
# Parameter init (deterministic, PyTorch Conv1d-style uniform init)
# --------------------------------------------------------------------------- #
def init_dsconv_params(key, cin, cout, ksize, dtype=jnp.float32):
    k1, k2, k3, k4 = jax.random.split(key, 4)
    bd = 1.0 / np.sqrt(ksize)                 # depthwise: groups=cin -> fan_in=ksize
    wdw = jax.random.uniform(k1, (ksize, cin), dtype, -bd, bd)
    bdw = jax.random.uniform(k2, (1, cin), dtype, -bd, bd)
    bp = 1.0 / np.sqrt(cin)                   # pointwise: kernel 1 -> fan_in=cin
    wpw = jax.random.uniform(k3, (cin, cout), dtype, -bp, bp)
    bpw = jax.random.uniform(k4, (1, cout), dtype, -bp, bp)
    return (wdw, bdw, wpw, bpw)


def init_convcnp_cnn_params(key, num_filters, kernel_size, num_blocks,
                            num_convs_per_block):
    params = []
    for i in range(num_blocks):
        block = []
        block_in = 2 * num_filters if i == 0 else num_filters
        for j in range(num_convs_per_block):
            key, sub = jax.random.split(key)
            cin = block_in if j == 0 else num_filters
            block.append(init_dsconv_params(sub, cin, num_filters, kernel_size))
        params.append(block)
    return params


# --------------------------------------------------------------------------- #
# Pure-JAX reference (mirrors the PyTorch module op-for-op)
# --------------------------------------------------------------------------- #
def _ref_dsconv(x, params):
    wdw, bdw, wpw, bpw = params
    K = wdw.shape[0]
    pad = K // 2
    B, L, Cin = x.shape
    xp = jnp.pad(x, ((0, 0), (pad, pad), (0, 0)))
    acc = sum(xp[:, k:k + L, :] * wdw[k] for k in range(K)) + bdw[0]
    return acc @ wpw + bpw[0]


def _ref_forward(x, params, layer_id=-1):
    layers = []
    h = x
    for i, block in enumerate(params):
        is_residual = (i != 0)
        block_in = h
        for j, p in enumerate(block):
            h = _ref_dsconv(h, p)
            if j != len(block) - 1:
                h = jnp.maximum(h, 0.0)       # ReLU between convs
        if is_residual:
            h = h + block_in
        h = jnp.maximum(h, 0.0)               # block activation
        layers.append(h)
    return layers[layer_id]


# --------------------------------------------------------------------------- #
if __name__ == "__main__":
    num_of_filters = 32
    kernel_size_CNN = 5
    num_residual_blocks = 2
    num_convolutions_per_block = 2
    B, L = 2, 16

    key = jax.random.PRNGKey(0)
    pkey, xkey = jax.random.split(key)

    params = init_convcnp_cnn_params(pkey, num_of_filters, kernel_size_CNN,
                                     num_residual_blocks,
                                     num_convolutions_per_block)

    # PyTorch Conv1d input is NCW: (B, 2*num_filters, L); kernel is channel-last.
    x_ncw = jax.random.normal(xkey, (B, 2 * num_of_filters, L), jnp.float32)
    x = jnp.transpose(x_ncw, (0, 2, 1))

    ref = _ref_forward(x, params, layer_id=-1)

    # f32 MXU path: validated tightly against the pure-JAX reference.
    out_f32 = off_the_grid_convcnp_cnn(x, params, layer_id=-1,
                                       matmul_dtype=jnp.float32)
    out_f32 = jax.block_until_ready(out_f32)
    assert out_f32.shape == (B, L, num_of_filters)
    np.testing.assert_allclose(np.asarray(out_f32), np.asarray(ref),
                               rtol=2e-4, atol=2e-4)

    # Default bf16-input MXU path (f32 accumulation): loose accuracy smoke test.
    out_bf16 = off_the_grid_convcnp_cnn(x, params, layer_id=-1)
    out_bf16 = jax.block_until_ready(out_bf16)
    assert out_bf16.shape == (B, L, num_of_filters)
    assert np.all(np.isfinite(np.asarray(out_bf16)))
    np.testing.assert_allclose(np.asarray(out_bf16), np.asarray(ref),
                               rtol=5e-2, atol=5e-2)

    print("KERNEL_OK")
</pallas_src>

<mosaic_0001>
module attributes {stable_mosaic.version = 11 : i64} {
  func.func @_fused_cnn_kernel(%arg0: i32, %arg1: memref<16x64xf32, #tpu.memory_space<vmem>>, %arg2: memref<320x32xf32, #tpu.memory_space<vmem>>, %arg3: memref<1x32xf32, #tpu.memory_space<vmem>>, %arg4: memref<160x32xf32, #tpu.memory_space<vmem>>, %arg5: memref<1x32xf32, #tpu.memory_space<vmem>>, %arg6: memref<160x32xf32, #tpu.memory_space<vmem>>, %arg7: memref<1x32xf32, #tpu.memory_space<vmem>>, %arg8: memref<160x32xf32, #tpu.memory_space<vmem>>, %arg9: memref<1x32xf32, #tpu.memory_space<vmem>>, %arg10: memref<16x32xf32, #tpu.memory_space<vmem>>) attributes {dimension_semantics = [#tpu.dimension_semantics<parallel>], iteration_bounds = array<i64: 2>, scalar_prefetch = 0 : i64, scratch_operands = 0 : i64, tpu.core_type = #tpu.core_type<tc>, window_params = [{transform_indices = @transform_0, window_bounds = array<i64: 16, 64>}, {pipeline_mode = #tpu.pipeline_mode<synchronous>, transform_indices = @transform_1, window_bounds = array<i64: 320, 32>}, {pipeline_mode = #tpu.pipeline_mode<synchronous>, transform_indices = @transform_2, window_bounds = array<i64: 1, 32>}, {pipeline_mode = #tpu.pipeline_mode<synchronous>, transform_indices = @transform_3, window_bounds = array<i64: 160, 32>}, {pipeline_mode = #tpu.pipeline_mode<synchronous>, transform_indices = @transform_4, window_bounds = array<i64: 1, 32>}, {pipeline_mode = #tpu.pipeline_mode<synchronous>, transform_indices = @transform_5, window_bounds = array<i64: 160, 32>}, {pipeline_mode = #tpu.pipeline_mode<synchronous>, transform_indices = @transform_6, window_bounds = array<i64: 1, 32>}, {pipeline_mode = #tpu.pipeline_mode<synchronous>, transform_indices = @transform_7, window_bounds = array<i64: 160, 32>}, {pipeline_mode = #tpu.pipeline_mode<synchronous>, transform_indices = @transform_8, window_bounds = array<i64: 1, 32>}, {transform_indices = @transform_9, window_bounds = array<i64: 16, 32>}]} {
    %0 = tpu.iota {dimensions = array<i32: 0>} : vector<16x1xi32>
    %c16_i32 = arith.constant 16 : i32
    %c0_i32 = arith.constant 0 : i32
    %1 = arith.cmpi eq, %c16_i32, %c0_i32 : i32
    %c1_i32 = arith.constant 1 : i32
    %2 = arith.select %1, %c1_i32, %c16_i32 : i32
    %3 = vector.broadcast %2 : i32 to vector<16x1xi32>
    %4 = arith.remsi %0, %3 : vector<16x1xi32>
    %c0_i32_0 = arith.constant 0 : i32
    %5 = vector.broadcast %c0_i32_0 : i32 to vector<16x1xi32>
    %6 = arith.cmpi ne, %4, %5 : vector<16x1xi32>
    %c0_i32_1 = arith.constant 0 : i32
    %7 = vector.broadcast %c0_i32_1 : i32 to vector<16x1xi32>
    %8 = arith.cmpi slt, %4, %7 : vector<16x1xi32>
    %c0_i32_2 = arith.constant 0 : i32
    %9 = arith.cmpi slt, %2, %c0_i32_2 : i32
    %10 = vector.broadcast %9 : i1 to vector<16x1xi1>
    %11 = vector.broadcast %10 : vector<16x1xi1> to vector<16x1xi1>
    %12 = arith.xori %8, %11 : vector<16x1xi1>
    %13 = arith.andi %12, %6 : vector<16x1xi1>
    %14 = vector.broadcast %2 : i32 to vector<16x1xi32>
    %15 = arith.addi %4, %14 : vector<16x1xi32>
    %16 = arith.select %13, %15, %4 : vector<16x1xi1>, vector<16x1xi32>
    %c2_i32 = arith.constant 2 : i32
    %17 = vector.broadcast %c2_i32 : i32 to vector<16x1xi32>
    %18 = arith.cmpi sge, %16, %17 : vector<16x1xi32>
    %19 = arith.extui %18 : vector<16x1xi1> to vector<16x1xi32>
    %20 = arith.sitofp %19 : vector<16x1xi32> to vector<16x1xf32>
    %21 = vector.shape_cast %20 : vector<16x1xf32> to vector<16x1xf32>
    %22 = vector.broadcast %21 : vector<16x1xf32> to vector<16x32xf32>
    %c1_i32_3 = arith.constant 1 : i32
    %23 = vector.broadcast %c1_i32_3 : i32 to vector<16x1xi32>
    %24 = arith.cmpi sge, %16, %23 : vector<16x1xi32>
    %25 = arith.extui %24 : vector<16x1xi1> to vector<16x1xi32>
    %26 = arith.sitofp %25 : vector<16x1xi32> to vector<16x1xf32>
    %27 = vector.shape_cast %26 : vector<16x1xf32> to vector<16x1xf32>
    %28 = vector.broadcast %27 : vector<16x1xf32> to vector<16x32xf32>
    %c15_i32 = arith.constant 15 : i32
    %29 = vector.broadcast %c15_i32 : i32 to vector<16x1xi32>
    %30 = arith.cmpi slt, %16, %29 : vector<16x1xi32>
    %31 = arith.extui %30 : vector<16x1xi1> to vector<16x1xi32>
    %32 = arith.sitofp %31 : vector<16x1xi32> to vector<16x1xf32>
    %33 = vector.shape_cast %32 : vector<16x1xf32> to vector<16x1xf32>
    %34 = vector.broadcast %33 : vector<16x1xf32> to vector<16x32xf32>
    %c14_i32 = arith.constant 14 : i32
    %35 = vector.broadcast %c14_i32 : i32 to vector<16x1xi32>
    %36 = arith.cmpi slt, %16, %35 : vector<16x1xi32>
    %37 = arith.extui %36 : vector<16x1xi1> to vector<16x1xi32>
    %38 = arith.sitofp %37 : vector<16x1xi32> to vector<16x1xf32>
    %39 = vector.shape_cast %38 : vector<16x1xf32> to vector<16x1xf32>
    %40 = vector.broadcast %39 : vector<16x1xf32> to vector<16x32xf32>
    %c2_i32_4 = arith.constant 2 : i32
    %41 = vector.broadcast %c2_i32_4 : i32 to vector<16x1xi32>
    %42 = arith.cmpi sge, %16, %41 : vector<16x1xi32>
    %43 = arith.extui %42 : vector<16x1xi1> to vector<16x1xi32>
    %44 = arith.sitofp %43 : vector<16x1xi32> to vector<16x1xf32>
    %45 = vector.shape_cast %44 : vector<16x1xf32> to vector<16x1xf32>
    %46 = vector.broadcast %45 : vector<16x1xf32> to vector<16x64xf32>
    %c1_i32_5 = arith.constant 1 : i32
    %47 = vector.broadcast %c1_i32_5 : i32 to vector<16x1xi32>
    %48 = arith.cmpi sge, %16, %47 : vector<16x1xi32>
    %49 = arith.extui %48 : vector<16x1xi1> to vector<16x1xi32>
    %50 = arith.sitofp %49 : vector<16x1xi32> to vector<16x1xf32>
    %51 = vector.shape_cast %50 : vector<16x1xf32> to vector<16x1xf32>
    %52 = vector.broadcast %51 : vector<16x1xf32> to vector<16x64xf32>
    %c15_i32_6 = arith.constant 15 : i32
    %53 = vector.broadcast %c15_i32_6 : i32 to vector<16x1xi32>
    %54 = arith.cmpi slt, %16, %53 : vector<16x1xi32>
    %55 = arith.extui %54 : vector<16x1xi1> to vector<16x1xi32>
    %56 = arith.sitofp %55 : vector<16x1xi32> to vector<16x1xf32>
    %57 = vector.shape_cast %56 : vector<16x1xf32> to vector<16x1xf32>
    %58 = vector.broadcast %57 : vector<16x1xf32> to vector<16x64xf32>
    %c14_i32_7 = arith.constant 14 : i32
    %59 = vector.broadcast %c14_i32_7 : i32 to vector<16x1xi32>
    %60 = arith.cmpi slt, %16, %59 : vector<16x1xi32>
    %61 = arith.extui %60 : vector<16x1xi1> to vector<16x1xi32>
    %62 = arith.sitofp %61 : vector<16x1xi32> to vector<16x1xf32>
    %63 = vector.shape_cast %62 : vector<16x1xf32> to vector<16x1xf32>
    %64 = vector.broadcast %63 : vector<16x1xf32> to vector<16x64xf32>
    %c0 = arith.constant 0 : index
    %c0_8 = arith.constant 0 : index
    %65 = vector.load %arg1[%c0, %c0_8] : memref<16x64xf32, #tpu.memory_space<vmem>>, vector<16x64xf32>
    %c0_9 = arith.constant 0 : index
    %c0_10 = arith.constant 0 : index
    %66 = vector.load %arg2[%c0_9, %c0_10] : memref<320x32xf32, #tpu.memory_space<vmem>>, vector<320x32xf32>
    %c0_11 = arith.constant 0 : index
    %c0_12 = arith.constant 0 : index
    %67 = vector.load %arg3[%c0_11, %c0_12] : memref<1x32xf32, #tpu.memory_space<vmem>>, vector<1x32xf32>
    %c2_i32_13 = arith.constant 2 : i32
    %68 = tpu.dynamic_rotate %65 by %c2_i32_13 dim 0 : vector<16x64xf32>, i32 -> vector<16x64xf32>
    %69 = arith.mulf %68, %46 : vector<16x64xf32>
    %c1_i32_14 = arith.constant 1 : i32
    %70 = tpu.dynamic_rotate %65 by %c1_i32_14 dim 0 : vector<16x64xf32>, i32 -> vector<16x64xf32>
    %71 = arith.mulf %70, %52 : vector<16x64xf32>
    %c15_i32_15 = arith.constant 15 : i32
    %72 = tpu.dynamic_rotate %65 by %c15_i32_15 dim 0 : vector<16x64xf32>, i32 -> vector<16x64xf32>
    %73 = arith.mulf %72, %58 : vector<16x64xf32>
    %c14_i32_16 = arith.constant 14 : i32
    %74 = tpu.dynamic_rotate %65 by %c14_i32_16 dim 0 : vector<16x64xf32>, i32 -> vector<16x64xf32>
    %75 = arith.mulf %74, %64 : vector<16x64xf32>
    %76 = tpu.concatenate %69, %71, %65, %73, %75 in 1 : vector<16x64xf32>, vector<16x64xf32>, vector<16x64xf32>, vector<16x64xf32>, vector<16x64xf32> -> vector<16x320xf32>
    %cst = arith.constant dense<0.000000e+00> : vector<16x32xf32>
    %77 = tpu.matmul %76, %66, %cst {dimension_numbers = #tpu.dot_dimension_numbers<[1], [0], [0], [1], [0, 0, 1, 1], [], []>} : vector<16x320xf32>, vector<320x32xf32>, vector<16x32xf32> -> vector<16x32xf32>
    %78 = vector.broadcast %67 : vector<1x32xf32> to vector<16x32xf32>
    %79 = arith.addf %77, %78 : vector<16x32xf32>
    %cst_17 = arith.constant 0.000000e+00 : f32
    %80 = vector.broadcast %cst_17 : f32 to vector<16x32xf32>
    %81 = arith.maximumf %79, %80 : vector<16x32xf32>
    %c0_18 = arith.constant 0 : index
    %c0_19 = arith.constant 0 : index
    %82 = vector.load %arg4[%c0_18, %c0_19] : memref<160x32xf32, #tpu.memory_space<vmem>>, vector<160x32xf32>
    %c0_20 = arith.constant 0 : index
    %c0_21 = arith.constant 0 : index
    %83 = vector.load %arg5[%c0_20, %c0_21] : memref<1x32xf32, #tpu.memory_space<vmem>>, vector<1x32xf32>
    %c2_i32_22 = arith.constant 2 : i32
    %84 = tpu.dynamic_rotate %81 by %c2_i32_22 dim 0 : vector<16x32xf32>, i32 -> vector<16x32xf32>
    %85 = arith.mulf %84, %22 : vector<16x32xf32>
    %c1_i32_23 = arith.constant 1 : i32
    %86 = tpu.dynamic_rotate %81 by %c1_i32_23 dim 0 : vector<16x32xf32>, i32 -> vector<16x32xf32>
    %87 = arith.mulf %86, %28 : vector<16x32xf32>
    %c15_i32_24 = arith.constant 15 : i32
    %88 = tpu.dynamic_rotate %81 by %c15_i32_24 dim 0 : vector<16x32xf32>, i32 -> vector<16x32xf32>
    %89 = arith.mulf %88, %34 : vector<16x32xf32>
    %c14_i32_25 = arith.constant 14 : i32
    %90 = tpu.dynamic_rotate %81 by %c14_i32_25 dim 0 : vector<16x32xf32>, i32 -> vector<16x32xf32>
    %91 = arith.mulf %90, %40 : vector<16x32xf32>
    %92 = tpu.concatenate %85, %87, %81, %89, %91 in 1 : vector<16x32xf32>, vector<16x32xf32>, vector<16x32xf32>, vector<16x32xf32>, vector<16x32xf32> -> vector<16x160xf32>
    %cst_26 = arith.constant dense<0.000000e+00> : vector<16x32xf32>
    %93 = tpu.matmul %92, %82, %cst_26 {dimension_numbers = #tpu.dot_dimension_numbers<[1], [0], [0], [1], [0, 0, 1, 1], [], []>} : vector<16x160xf32>, vector<160x32xf32>, vector<16x32xf32> -> vector<16x32xf32>
    %94 = vector.broadcast %83 : vector<1x32xf32> to vector<16x32xf32>
    %95 = arith.addf %93, %94 : vector<16x32xf32>
    %cst_27 = arith.constant 0.000000e+00 : f32
    %96 = vector.broadcast %cst_27 : f32 to vector<16x32xf32>
    %97 = arith.maximumf %95, %96 : vector<16x32xf32>
    %c0_28 = arith.constant 0 : index
    %c0_29 = arith.constant 0 : index
    %98 = vector.load %arg6[%c0_28, %c0_29] : memref<160x32xf32, #tpu.memory_space<vmem>>, vector<160x32xf32>
    %c0_30 = arith.constant 0 : index
    %c0_31 = arith.constant 0 : index
    %99 = vector.load %arg7[%c0_30, %c0_31] : memref<1x32xf32, #tpu.memory_space<vmem>>, vector<1x32xf32>
    %c2_i32_32 = arith.constant 2 : i32
    %100 = tpu.dynamic_rotate %97 by %c2_i32_32 dim 0 : vector<16x32xf32>, i32 -> vector<16x32xf32>
    %101 = arith.mulf %100, %22 : vector<16x32xf32>
    %c1_i32_33 = arith.constant 1 : i32
    %102 = tpu.dynamic_rotate %97 by %c1_i32_33 dim 0 : vector<16x32xf32>, i32 -> vector<16x32xf32>
    %103 = arith.mulf %102, %28 : vector<16x32xf32>
    %c15_i32_34 = arith.constant 15 : i32
    %104 = tpu.dynamic_rotate %97 by %c15_i32_34 dim 0 : vector<16x32xf32>, i32 -> vector<16x32xf32>
    %105 = arith.mulf %104, %34 : vector<16x32xf32>
    %c14_i32_35 = arith.constant 14 : i32
    %106 = tpu.dynamic_rotate %97 by %c14_i32_35 dim 0 : vector<16x32xf32>, i32 -> vector<16x32xf32>
    %107 = arith.mulf %106, %40 : vector<16x32xf32>
    %108 = tpu.concatenate %101, %103, %97, %105, %107 in 1 : vector<16x32xf32>, vector<16x32xf32>, vector<16x32xf32>, vector<16x32xf32>, vector<16x32xf32> -> vector<16x160xf32>
    %cst_36 = arith.constant dense<0.000000e+00> : vector<16x32xf32>
    %109 = tpu.matmul %108, %98, %cst_36 {dimension_numbers = #tpu.dot_dimension_numbers<[1], [0], [0], [1], [0, 0, 1, 1], [], []>} : vector<16x160xf32>, vector<160x32xf32>, vector<16x32xf32> -> vector<16x32xf32>
    %110 = vector.broadcast %99 : vector<1x32xf32> to vector<16x32xf32>
    %111 = arith.addf %109, %110 : vector<16x32xf32>
    %cst_37 = arith.constant 0.000000e+00 : f32
    %112 = vector.broadcast %cst_37 : f32 to vector<16x32xf32>
    %113 = arith.maximumf %111, %112 : vector<16x32xf32>
    %c0_38 = arith.constant 0 : index
    %c0_39 = arith.constant 0 : index
    %114 = vector.load %arg8[%c0_38, %c0_39] : memref<160x32xf32, #tpu.memory_space<vmem>>, vector<160x32xf32>
    %c0_40 = arith.constant 0 : index
    %c0_41 = arith.constant 0 : index
    %115 = vector.load %arg9[%c0_40, %c0_41] : memref<1x32xf32, #tpu.memory_space<vmem>>, vector<1x32xf32>
    %c2_i32_42 = arith.constant 2 : i32
    %116 = tpu.dynamic_rotate %113 by %c2_i32_42 dim 0 : vector<16x32xf32>, i32 -> vector<16x32xf32>
    %117 = arith.mulf %116, %22 : vector<16x32xf32>
    %c1_i32_43 = arith.constant 1 : i32
    %118 = tpu.dynamic_rotate %113 by %c1_i32_43 dim 0 : vector<16x32xf32>, i32 -> vector<16x32xf32>
    %119 = arith.mulf %118, %28 : vector<16x32xf32>
    %c15_i32_44 = arith.constant 15 : i32
    %120 = tpu.dynamic_rotate %113 by %c15_i32_44 dim 0 : vector<16x32xf32>, i32 -> vector<16x32xf32>
    %121 = arith.mulf %120, %34 : vector<16x32xf32>
    %c14_i32_45 = arith.constant 14 : i32
    %122 = tpu.dynamic_rotate %113 by %c14_i32_45 dim 0 : vector<16x32xf32>, i32 -> vector<16x32xf32>
    %123 = arith.mulf %122, %40 : vector<16x32xf32>
    %124 = tpu.concatenate %117, %119, %113, %121, %123 in 1 : vector<16x32xf32>, vector<16x32xf32>, vector<16x32xf32>, vector<16x32xf32>, vector<16x32xf32> -> vector<16x160xf32>
    %cst_46 = arith.constant dense<0.000000e+00> : vector<16x32xf32>
    %125 = tpu.matmul %124, %114, %cst_46 {dimension_numbers = #tpu.dot_dimension_numbers<[1], [0], [0], [1], [0, 0, 1, 1], [], []>} : vector<16x160xf32>, vector<160x32xf32>, vector<16x32xf32> -> vector<16x32xf32>
    %126 = vector.broadcast %115 : vector<1x32xf32> to vector<16x32xf32>
    %127 = arith.addf %125, %126 : vector<16x32xf32>
    %128 = arith.addf %127, %97 : vector<16x32xf32>
    %cst_47 = arith.constant 0.000000e+00 : f32
    %129 = vector.broadcast %cst_47 : f32 to vector<16x32xf32>
    %130 = arith.maximumf %128, %129 : vector<16x32xf32>
    %c0_48 = arith.constant 0 : index
    %c0_49 = arith.constant 0 : index
    %131 = vector.load %arg10[%c0_48, %c0_49] : memref<16x32xf32, #tpu.memory_space<vmem>>, vector<16x32xf32>
    tpu.vector_store %arg10[%c0_48, %c0_49], %130 {strides = array<i32>} : memref<16x32xf32, #tpu.memory_space<vmem>>, vector<16x32xf32>,
    return
  }
  func.func @transform_0(%arg0: i32) -> (i32, i32) {
    %c0_i32 = arith.constant 0 : i32
    %c0_i32_0 = arith.constant 0 : i32
    return %arg0, %c0_i32 : i32, i32
  }
  func.func @transform_1(%arg0: i32) -> (i32, i32) {
    %c0_i32 = arith.constant 0 : i32
    %c0_i32_0 = arith.constant 0 : i32
    %c0_i32_1 = arith.constant 0 : i32
    return %c0_i32, %c0_i32_0 : i32, i32
  }
  func.func @transform_2(%arg0: i32) -> (i32, i32) {
    %c0_i32 = arith.constant 0 : i32
    %c0_i32_0 = arith.constant 0 : i32
    %c0_i32_1 = arith.constant 0 : i32
    return %c0_i32, %c0_i32_0 : i32, i32
  }
  func.func @transform_3(%arg0: i32) -> (i32, i32) {
    %c0_i32 = arith.constant 0 : i32
    %c0_i32_0 = arith.constant 0 : i32
    %c0_i32_1 = arith.constant 0 : i32
    return %c0_i32, %c0_i32_0 : i32, i32
  }
  func.func @transform_4(%arg0: i32) -> (i32, i32) {
    %c0_i32 = arith.constant 0 : i32
    %c0_i32_0 = arith.constant 0 : i32
    %c0_i32_1 = arith.constant 0 : i32
    return %c0_i32, %c0_i32_0 : i32, i32
  }
  func.func @transform_5(%arg0: i32) -> (i32, i32) {
    %c0_i32 = arith.constant 0 : i32
    %c0_i32_0 = arith.constant 0 : i32
    %c0_i32_1 = arith.constant 0 : i32
    return %c0_i32, %c0_i32_0 : i32, i32
  }
  func.func @transform_6(%arg0: i32) -> (i32, i32) {
    %c0_i32 = arith.constant 0 : i32
    %c0_i32_0 = arith.constant 0 : i32
    %c0_i32_1 = arith.constant 0 : i32
    return %c0_i32, %c0_i32_0 : i32, i32
  }
  func.func @transform_7(%arg0: i32) -> (i32, i32) {
    %c0_i32 = arith.constant 0 : i32
    %c0_i32_0 = arith.constant 0 : i32
    %c0_i32_1 = arith.constant 0 : i32
    return %c0_i32, %c0_i32_0 : i32, i32
  }
  func.func @transform_8(%arg0: i32) -> (i32, i32) {
    %c0_i32 = arith.constant 0 : i32
    %c0_i32_0 = arith.constant 0 : i32
    %c0_i32_1 = arith.constant 0 : i32
    return %c0_i32, %c0_i32_0 : i32, i32
  }
  func.func @transform_9(%arg0: i32) -> (i32, i32) {
    %c0_i32 = arith.constant 0 : i32
    %c0_i32_0 = arith.constant 0 : i32
    return %arg0, %c0_i32 : i32, i32
  }
}

</mosaic_0001>

<llo_original>
// kernel: tpu_custom_call.1
$region0: #{tpu_custom_call.1}
  #allocation0 [shape = 'u32[]', space=smem, size = 0x4, offset = 0x4, fixed_abs, tag = 'smem constant byte address 0x4 - core index']
  #allocation1 [shape = 'u32[144,128]{1,0:T(1,128)}', space=vmem, size = 0x12000, scoped, tag = 'internal scratch']
  %s0 = inlined_call_operand.vmem [shape: f32[32,64], index: 0, kind: input, shape index: {}]
  %s1 = inlined_call_operand.vmem [shape: f32[320,32], index: 1, kind: input, shape index: {}]
  %s2 = inlined_call_operand.vmem [shape: f32[1,32], index: 2, kind: input, shape index: {}]
  %s3 = inlined_call_operand.vmem [shape: f32[160,32], index: 3, kind: input, shape index: {}]
  %s4 = inlined_call_operand.vmem [shape: f32[1,32], index: 4, kind: input, shape index: {}]
  %s5 = inlined_call_operand.vmem [shape: f32[160,32], index: 5, kind: input, shape index: {}]
  %s6 = inlined_call_operand.vmem [shape: f32[1,32], index: 6, kind: input, shape index: {}]
  %s7 = inlined_call_operand.vmem [shape: f32[160,32], index: 7, kind: input, shape index: {}]
  %s8 = inlined_call_operand.vmem [shape: f32[1,32], index: 8, kind: input, shape index: {}]
  %s9 = inlined_call_operand.hbm [shape: f32[32,32], index: 9, kind: output, shape index: {}]
  %s10 = sld [smem:[#allocation0]]
  $region69: #{tpu_custom_call.1} parent=0
    _
  %s12 = ssub.s32 1, %s10
  %s13 = scalar_select 0, %s12, %s10
  $region1: #{tpu_custom_call.1} parent=0
    #allocation2 [shape = 'u8[16384]{0}', space=vmem, size = 0x4000, scoped, tag = 'output window, operand 0']
    #allocation3 [shape = 's32[2]{0}', space=sflag, size = 0x8, scoped, tag = 'scoped memory for tpu_custom_call.1']
    %14 = vsyncpa [#allocation3], 0
    %s15 = scalar_lea.sflag [#allocation3], 1
    %16 = vsyncpa %s15, 0
    loop: start=0, step=1, limit=4
    $region2: #{tpu_custom_call.1} parent=1 // loop_pre_header
      _
    $region3: #{tpu_custom_call.1} parent=1 // loop_header
      %s18 = sphi 0, %s22
      %p19 = scmp.ge.s32.totalorder %s18, 4
      %s28 = sphi 0, %s30
      %s31 = sphi 0, %s28
      %s32 = sphi 0, %s31
      %s48 = sphi 0, %s32
      %s52 = sphi 0, %s52
      %s54 = sphi 0, %s52
      %s55 = sphi 0, %s54
      %s69 = sphi 0, %s55
      %s73 = sphi 0, %s73
      %s75 = sphi 0, %s73
      %s76 = sphi 0, %s75
      %s90 = sphi 0, %s76
      %s94 = sphi 0, %s94
      %s96 = sphi 0, %s94
      %s97 = sphi 0, %s96
      %s111 = sphi 0, %s97
      %s115 = sphi 0, %s115
      %s117 = sphi 0, %s115
      %s118 = sphi 0, %s117
      %s132 = sphi 0, %s118
      %s136 = sphi 0, %s136
      %s138 = sphi 0, %s136
      %s139 = sphi 0, %s138
      %s153 = sphi 0, %s139
      %s157 = sphi 0, %s157
      %s159 = sphi 0, %s157
      %s160 = sphi 0, %s159
      %s174 = sphi 0, %s160
      %s178 = sphi 0, %s178
      %s180 = sphi 0, %s178
      %s181 = sphi 0, %s180
      %s195 = sphi 0, %s181
      %s199 = sphi 0, %s199
      %s201 = sphi 0, %s199
      %s202 = sphi 0, %s201
      %s216 = sphi 0, %s202
      %s222 = sphi 0, %s224
      %s225 = sphi 0, %s222
      %s226 = sphi 0, %s225
      %s242 = sphi 0, %s226
    $region4: #{tpu_custom_call.1} parent=1 // loop_header_branch
      %21 = sbr.rel (%p19) target = $region8
    $region5: #{tpu_custom_call.1} parent=1 // loop_body
      %s23 = ssub.s32 %s18, 1
      %s24 = ssub.s32 %s18, 2
      %s25 = sadd.s32 %s18, 1
      %s26 = ssub.s32 %s18, %s25
      %p27 = scmp.eq.s32.totalorder %s26, 0
      %s29 = sadd.s32 %s28, 1
      %s30 = scalar_select %p27, %s28, %s29
      %p33 = pneg %p27
      %p34 = scmp.eq.s32.totalorder %s18, 1
      %p35 = por %p33, %p34
      %p36 = scmp.ne.s32.totalorder %s28, %s31
      %p37 = scmp.eq.s32.totalorder %s18, 0
      %p38 = por %p36, %p37
      %p39 = scmp.ne.s32.totalorder %s28, %s31
      %p40 = scmp.eq.s32.totalorder %s23, 1
      %p41 = por %p39, %p40
      %p42 = scmp.ne.s32.totalorder %s31, %s32
      %p43 = scmp.eq.s32.totalorder %s23, 0
      %p44 = por %p42, %p43
      %p45 = scmp.ne.s32.totalorder %s31, %s32
      %p46 = scmp.eq.s32.totalorder %s24, 1
      %p47 = por %p45, %p46
      %p49 = scmp.ne.s32.totalorder %s32, %s48
      %p50 = scmp.eq.s32.totalorder %s24, 0
      %p51 = por %p49, %p50
      %s53 = sadd.s32 %s52, 1
      %p56 = scmp.eq.s32.totalorder %s18, 1
      %p57 = scmp.ne.s32.totalorder %s52, %s54
      %p58 = scmp.eq.s32.totalorder %s18, 0
      %p59 = por %p57, %p58
      %p60 = scmp.ne.s32.totalorder %s52, %s54
      %p61 = scmp.eq.s32.totalorder %s23, 1
      %p62 = por %p60, %p61
      %p63 = scmp.ne.s32.totalorder %s54, %s55
      %p64 = scmp.eq.s32.totalorder %s23, 0
      %p65 = por %p63, %p64
      %p66 = scmp.ne.s32.totalorder %s54, %s55
      %p67 = scmp.eq.s32.totalorder %s24, 1
      %p68 = por %p66, %p67
      %p70 = scmp.ne.s32.totalorder %s55, %s69
      %p71 = scmp.eq.s32.totalorder %s24, 0
      %p72 = por %p70, %p71
      %s74 = sadd.s32 %s73, 1
      %p77 = scmp.eq.s32.totalorder %s18, 1
      %p78 = scmp.ne.s32.totalorder %s73, %s75
      %p79 = scmp.eq.s32.totalorder %s18, 0
      %p80 = por %p78, %p79
      %p81 = scmp.ne.s32.totalorder %s73, %s75
      %p82 = scmp.eq.s32.totalorder %s23, 1
      %p83 = por %p81, %p82
      %p84 = scmp.ne.s32.totalorder %s75, %s76
      %p85 = scmp.eq.s32.totalorder %s23, 0
      %p86 = por %p84, %p85
      %p87 = scmp.ne.s32.totalorder %s75, %s76
      %p88 = scmp.eq.s32.totalorder %s24, 1
      %p89 = por %p87, %p88
      %p91 = scmp.ne.s32.totalorder %s76, %s90
      %p92 = scmp.eq.s32.totalorder %s24, 0
      %p93 = por %p91, %p92
      %s95 = sadd.s32 %s94, 1
      %p98 = scmp.eq.s32.totalorder %s18, 1
      %p99 = scmp.ne.s32.totalorder %s94, %s96
      %p100 = scmp.eq.s32.totalorder %s18, 0
      %p101 = por %p99, %p100
      %p102 = scmp.ne.s32.totalorder %s94, %s96
      %p103 = scmp.eq.s32.totalorder %s23, 1
      %p104 = por %p102, %p103
      %p105 = scmp.ne.s32.totalorder %s96, %s97
      %p106 = scmp.eq.s32.totalorder %s23, 0
      %p107 = por %p105, %p106
      %p108 = scmp.ne.s32.totalorder %s96, %s97
      %p109 = scmp.eq.s32.totalorder %s24, 1
      %p110 = por %p108, %p109
      %p112 = scmp.ne.s32.totalorder %s97, %s111
      %p113 = scmp.eq.s32.totalorder %s24, 0
      %p114 = por %p112, %p113
      %s116 = sadd.s32 %s115, 1
      %p119 = scmp.eq.s32.totalorder %s18, 1
      %p120 = scmp.ne.s32.totalorder %s115, %s117
      %p121 = scmp.eq.s32.totalorder %s18, 0
      %p122 = por %p120, %p121
      %p123 = scmp.ne.s32.totalorder %s115, %s117
      %p124 = scmp.eq.s32.totalorder %s23, 1
      %p125 = por %p123, %p124
      %p126 = scmp.ne.s32.totalorder %s117, %s118
      %p127 = scmp.eq.s32.totalorder %s23, 0
      %p128 = por %p126, %p127
      %p129 = scmp.ne.s32.totalorder %s117, %s118
      %p130 = scmp.eq.s32.totalorder %s24, 1
      %p131 = por %p129, %p130
      %p133 = scmp.ne.s32.totalorder %s118, %s132
      %p134 = scmp.eq.s32.totalorder %s24, 0
      %p135 = por %p133, %p134
      %s137 = sadd.s32 %s136, 1
      %p140 = scmp.eq.s32.totalorder %s18, 1
      %p141 = scmp.ne.s32.totalorder %s136, %s138
      %p142 = scmp.eq.s32.totalorder %s18, 0
      %p143 = por %p141, %p142
      %p144 = scmp.ne.s32.totalorder %s136, %s138
      %p145 = scmp.eq.s32.totalorder %s23, 1
      %p146 = por %p144, %p145
      %p147 = scmp.ne.s32.totalorder %s138, %s139
      %p148 = scmp.eq.s32.totalorder %s23, 0
      %p149 = por %p147, %p148
      %p150 = scmp.ne.s32.totalorder %s138, %s139
      %p151 = scmp.eq.s32.totalorder %s24, 1
      %p152 = por %p150, %p151
      %p154 = scmp.ne.s32.totalorder %s139, %s153
      %p155 = scmp.eq.s32.totalorder %s24, 0
      %p156 = por %p154, %p155
      %s158 = sadd.s32 %s157, 1
      %p161 = scmp.eq.s32.totalorder %s18, 1
      %p162 = scmp.ne.s32.totalorder %s157, %s159
      %p163 = scmp.eq.s32.totalorder %s18, 0
      %p164 = por %p162, %p163
      %p165 = scmp.ne.s32.totalorder %s157, %s159
      %p166 = scmp.eq.s32.totalorder %s23, 1
      %p167 = por %p165, %p166
      %p168 = scmp.ne.s32.totalorder %s159, %s160
      %p169 = scmp.eq.s32.totalorder %s23, 0
      %p170 = por %p168, %p169
      %p171 = scmp.ne.s32.totalorder %s159, %s160
      %p172 = scmp.eq.s32.totalorder %s24, 1
      %p173 = por %p171, %p172
      %p175 = scmp.ne.s32.totalorder %s160, %s174
      %p176 = scmp.eq.s32.totalorder %s24, 0
      %p177 = por %p175, %p176
      %s179 = sadd.s32 %s178, 1
      %p182 = scmp.eq.s32.totalorder %s18, 1
      %p183 = scmp.ne.s32.totalorder %s178, %s180
      %p184 = scmp.eq.s32.totalorder %s18, 0
      %p185 = por %p183, %p184
      %p186 = scmp.ne.s32.totalorder %s178, %s180
      %p187 = scmp.eq.s32.totalorder %s23, 1
      %p188 = por %p186, %p187
      %p189 = scmp.ne.s32.totalorder %s180, %s181
      %p190 = scmp.eq.s32.totalorder %s23, 0
      %p191 = por %p189, %p190
      %p192 = scmp.ne.s32.totalorder %s180, %s181
      %p193 = scmp.eq.s32.totalorder %s24, 1
      %p194 = por %p192, %p193
      %p196 = scmp.ne.s32.totalorder %s181, %s195
      %p197 = scmp.eq.s32.totalorder %s24, 0
      %p198 = por %p196, %p197
      %s200 = sadd.s32 %s199, 1
      %p203 = scmp.eq.s32.totalorder %s18, 1
      %p204 = scmp.ne.s32.totalorder %s199, %s201
      %p205 = scmp.eq.s32.totalorder %s18, 0
      %p206 = por %p204, %p205
      %p207 = scmp.ne.s32.totalorder %s199, %s201
      %p208 = scmp.eq.s32.totalorder %s23, 1
      %p209 = por %p207, %p208
      %p210 = scmp.ne.s32.totalorder %s201, %s202
      %p211 = scmp.eq.s32.totalorder %s23, 0
      %p212 = por %p210, %p211
      %p213 = scmp.ne.s32.totalorder %s201, %s202
      %p214 = scmp.eq.s32.totalorder %s24, 1
      %p215 = por %p213, %p214
      %p217 = scmp.ne.s32.totalorder %s202, %s216
      %p218 = scmp.eq.s32.totalorder %s24, 0
      %p219 = por %p217, %p218
      %s220 = ssub.s32 %s18, %s25
      %p221 = scmp.eq.s32.totalorder %s220, 0
      %s223 = sadd.s32 %s222, 1
      %s224 = scalar_select %p221, %s222, %s223
      %p227 = pneg %p221
      %p228 = scmp.eq.s32.totalorder %s18, 1
      %p229 = por %p227, %p228
      %p230 = scmp.ne.s32.totalorder %s222, %s225
      %p231 = scmp.eq.s32.totalorder %s18, 0
      %p232 = por %p230, %p231
      %p233 = scmp.ne.s32.totalorder %s222, %s225
      %p234 = scmp.eq.s32.totalorder %s23, 1
      %p235 = por %p233, %p234
      %p236 = scmp.ne.s32.totalorder %s225, %s226
      %p237 = scmp.eq.s32.totalorder %s23, 0
      %p238 = por %p236, %p237
      %p239 = scmp.ne.s32.totalorder %s225, %s226
      %p240 = scmp.eq.s32.totalorder %s24, 1
      %p241 = por %p239, %p240
      %p243 = scmp.ne.s32.totalorder %s226, %s242
      %p244 = scmp.eq.s32.totalorder %s24, 0
      %p245 = por %p243, %p244
      %p246 = scmp.le.s32.totalorder 1, %s18
      %p247 = scmp.lt.s32.totalorder %s18, 3
      %p248 = pnand %p246, %p247
      %p249 = pneg %p248
      // Predicated region
      $region9: #{tpu_custom_call.1} parent=5 // pred_check
        _
      $region10: #{tpu_custom_call.1} parent=5 // pred_check_branch
        %251 = sbr.rel (%p248) target = $region12
      $region11: #{tpu_custom_call.1} parent=5 // pred_region
        %s252 = ssub.s32 %s18, 1
        // Predicated region
        $region13: #{tpu_custom_call.1} parent=11 // pred_check
          %p253 = pneg %p65
        $region14: #{tpu_custom_call.1} parent=11 // pred_check_branch
          %255 = sbr.rel (%p253) target = $region16
        $region15: #{tpu_custom_call.1} parent=11 // pred_region
          _
        $region16: #{tpu_custom_call.1} parent=11 // pred_fallthru
          _
        // Predicated region
        $region17: #{tpu_custom_call.1} parent=11 // pred_check
          %p256 = pneg %p86
        $region18: #{tpu_custom_call.1} parent=11 // pred_check_branch
          %258 = sbr.rel (%p256) target = $region20
        $region19: #{tpu_custom_call.1} parent=11 // pred_region
          _
        $region20: #{tpu_custom_call.1} parent=11 // pred_fallthru
          _
        // Predicated region
        $region21: #{tpu_custom_call.1} parent=11 // pred_check
          %p259 = pneg %p107
        $region22: #{tpu_custom_call.1} parent=11 // pred_check_branch
          %261 = sbr.rel (%p259) target = $region24
        $region23: #{tpu_custom_call.1} parent=11 // pred_region
          _
        $region24: #{tpu_custom_call.1} parent=11 // pred_fallthru
          _
        // Predicated region
        $region25: #{tpu_custom_call.1} parent=11 // pred_check
          %p262 = pneg %p128
        $region26: #{tpu_custom_call.1} parent=11 // pred_check_branch
          %264 = sbr.rel (%p262) target = $region28
        $region27: #{tpu_custom_call.1} parent=11 // pred_region
          _
        $region28: #{tpu_custom_call.1} parent=11 // pred_fallthru
          _
        // Predicated region
        $region29: #{tpu_custom_call.1} parent=11 // pred_check
          %p265 = pneg %p149
        $region30: #{tpu_custom_call.1} parent=11 // pred_check_branch
          %267 = sbr.rel (%p265) target = $region32
        $region31: #{tpu_custom_call.1} parent=11 // pred_region
          _
        $region32: #{tpu_custom_call.1} parent=11 // pred_fallthru
          _
        // Predicated region
        $region33: #{tpu_custom_call.1} parent=11 // pred_check
          %p268 = pneg %p170
        $region34: #{tpu_custom_call.1} parent=11 // pred_check_branch
          %270 = sbr.rel (%p268) target = $region36
        $region35: #{tpu_custom_call.1} parent=11 // pred_region
          _
        $region36: #{tpu_custom_call.1} parent=11 // pred_fallthru
          _
        // Predicated region
        $region37: #{tpu_custom_call.1} parent=11 // pred_check
          %p271 = pneg %p191
        $region38: #{tpu_custom_call.1} parent=11 // pred_check_branch
          %273 = sbr.rel (%p271) target = $region40
        $region39: #{tpu_custom_call.1} parent=11 // pred_region
          _
        $region40: #{tpu_custom_call.1} parent=11 // pred_fallthru
          _
        // Predicated region
        $region41: #{tpu_custom_call.1} parent=11 // pred_check
          %p274 = pneg %p212
        $region42: #{tpu_custom_call.1} parent=11 // pred_check_branch
          %276 = sbr.rel (%p274) target = $region44
        $region43: #{tpu_custom_call.1} parent=11 // pred_region
          _
        $region44: #{tpu_custom_call.1} parent=11 // pred_fallthru
          _
      $region12: #{tpu_custom_call.1} parent=5 // pred_fallthru
        _
      %p277 = scmp.lt.s32.totalorder %s18, 2
      // Predicated region
      $region45: #{tpu_custom_call.1} parent=5 // pred_check
        %p278 = pneg %p277
      $region46: #{tpu_custom_call.1} parent=5 // pred_check_branch
        %280 = sbr.rel (%p278) target = $region48
      $region47: #{tpu_custom_call.1} parent=5 // pred_region
        // Predicated region
        $region49: #{tpu_custom_call.1} parent=47 // pred_check
          %p281 = pneg %p38
        $region50: #{tpu_custom_call.1} parent=47 // pred_check_branch
          %283 = sbr.rel (%p281) target = $region52
        $region51: #{tpu_custom_call.1} parent=47 // pred_region
          %s284 = smul.u32 2, %s18
          %p285 = scmp.lt.s32.totalorder %s284, 3
          %s286 = scalar_select %p285, %s284, 3
          %s287 = smul.addr %s286, 8
          %s288 = scalar_lea.vmem %s0, %s287
          %s289 = smul.u32 2, %s18
        $region52: #{tpu_custom_call.1} parent=47 // pred_fallthru
          _
      $region48: #{tpu_custom_call.1} parent=5 // pred_fallthru
        _
      %p290 = scmp.le.s32.totalorder 1, %s18
      %p291 = scmp.lt.s32.totalorder %s18, 3
      %p292 = pnand %p290, %p291
      %p293 = pneg %p292
      // Predicated region
      $region53: #{tpu_custom_call.1} parent=5 // pred_check
        _
      $region54: #{tpu_custom_call.1} parent=5 // pred_check_branch
        %295 = sbr.rel (%p292) target = $region56
      $region55: #{tpu_custom_call.1} parent=5 // pred_region
        %s296 = ssub.s32 %s18, 1
        %s297 = smul.u32 2, %s23
        %p298 = scmp.lt.s32.totalorder %s297, 3
        %s299 = scalar_select %p298, %s297, 3
        %s300 = smul.addr %s299, 8
        %s301 = scalar_lea.vmem %s0, %s300
        %p302 = pneg %p44
        %p303 = pneg %p41
        %p304 = pneg %p65
        %p305 = pneg %p62
        %p306 = pneg %p86
        %p307 = pneg %p83
        %p308 = pneg %p107
        %p309 = pneg %p104
        %p310 = pneg %p128
        %p311 = pneg %p125
        %p312 = pneg %p149
        %p313 = pneg %p146
        %p314 = pneg %p170
        %p315 = pneg %p167
        %p316 = pneg %p191
        %p317 = pneg %p188
        %p318 = pneg %p212
        %p319 = pneg %p209
        %p320 = pneg %p238
        %p321 = pneg %p235
        %s322 = sand.u32 %s225, 1
        %s323 = scalar_lea.sflag [#allocation3], %s322
        %s324 = sand.u32 %s225, 1
        %s325 = smul.addr %s324, 16
        %s326 = scalar_lea.vmem [#allocation2], %s325
        %s327 = smul.u32 2, %s23
        %p328 = scmp.lt.s32.totalorder %s327, 3
        %s329 = scalar_select %p328, %s327, 3
        %s330 = smul.addr %s329, 8
        %s331 = scalar_lea.vmem %s0, %s330
        %s332 = smul.u32 2, %s23
        %s333 = smul.u32 2, %s23
        %v334 = vlaneseq
        %v335 = vshrl.u32 %v334, 7
        %v336 = vadd.s32 %v335, 8
        %vm337 = vcmp.lt.s32.totalorder %v335, 0
        %v338 = vsub.s32 0, %v335
        %v339 = vsel %vm337, %v338, %v335
        %v340 = vshrl.u32 %v339, 4
        %v341 = vand.u32 %v339, 15
        %v342 = vsub.s32 0, %v341
        %v343 = vsel %vm337, %v342, %v341
        %vm344 = vcmp.lt.s32.totalorder %v336, 0
        %v345 = vsub.s32 0, %v336
        %v346 = vsel %vm344, %v345, %v336
        %v347 = vshrl.u32 %v346, 4
        %v348 = vand.u32 %v346, 15
        %v349 = vsub.s32 0, %v348
        %v350 = vsel %vm344, %v349, %v348
        %vm351 = vcmp.ne.s32.totalorder %v343, 0
        %vm352 = vcmp.ne.s32.totalorder %v350, 0
        %vm353 = vcmp.lt.s32.totalorder %v343, 0
        %vm354 = vcmp.lt.s32.totalorder %v350, 0
        %vm355 = vmand %vm353, %vm351
        %vm356 = vmand %vm354, %vm352
        %v357 = vadd.s32 %v343, 16
        %v358 = vadd.s32 %v350, 16
        %v359 = vsel %vm355, %v357, %v343
        %v360 = vsel %vm356, %v358, %v350
        %vm361 = vcmp.ge.s32.totalorder %v359, 2
        %vm362 = vcmp.ge.s32.totalorder %v360, 2
        %v363 = vsel %vm361, 1, 0
        %v364 = vsel %vm362, 1, 0
        %v365 = vcvt.s32.f32 %v363
        %v366 = vcvt.s32.f32 %v364
        %vm367 = vcmp.ge.s32.totalorder %v359, 1
        %vm368 = vcmp.ge.s32.totalorder %v360, 1
        %v369 = vsel %vm367, 1, 0
        %v370 = vsel %vm368, 1, 0
        %v371 = vcvt.s32.f32 %v369
        %v372 = vcvt.s32.f32 %v370
        %vm373 = vcmp.lt.s32.totalorder %v359, 15
        %vm374 = vcmp.lt.s32.totalorder %v360, 15
        %v375 = vsel %vm373, 1, 0
        %v376 = vsel %vm374, 1, 0
        %v377 = vcvt.s32.f32 %v375
        %v378 = vcvt.s32.f32 %v376
        %vm379 = vcmp.lt.s32.totalorder %v359, 14
        %vm380 = vcmp.lt.s32.totalorder %v360, 14
        %v381 = vsel %vm379, 1, 0
        %v382 = vsel %vm380, 1, 0
        %v383 = vcvt.s32.f32 %v381
        %v384 = vcvt.s32.f32 %v382
        %v385 = vld [vmem:[%s331] sm:$0xff]
        %v386 = vld [vmem:[%s331 + $0x8] sm:$0xff]
        %v387 = vld [vmem:[%s1] sm:$0xff]
        %v388 = vld [vmem:[%s1 + $0x8] sm:$0xff]
        %v389 = vld [vmem:[%s1 + $0x10] sm:$0xff]
        %v390 = vld [vmem:[%s1 + $0x18] sm:$0xff]
        %v391 = vld [vmem:[%s1 + $0x20] sm:$0xff]
        %v392 = vld [vmem:[%s1 + $0x28] sm:$0xff]
        %v393 = vld [vmem:[%s1 + $0x30] sm:$0xff]
        %v394 = vld [vmem:[%s1 + $0x38] sm:$0xff]
        %v395 = vld [vmem:[%s1 + $0x40] sm:$0xff]
        %v396 = vld [vmem:[%s1 + $0x48] sm:$0xff]
        %v397 = vld [vmem:[%s1 + $0x50] sm:$0xff]
        %v398 = vld [vmem:[%s1 + $0x58] sm:$0xff]
        %v399 = vld [vmem:[%s1 + $0x60] sm:$0xff]
        %v400 = vld [vmem:[%s1 + $0x68] sm:$0xff]
        %v401 = vld [vmem:[%s1 + $0x70] sm:$0xff]
        %v402 = vld [vmem:[%s1 + $0x78] sm:$0xff]
        %v403 = vld [vmem:[%s1 + $0x80] sm:$0xff]
        %v404 = vld [vmem:[%s1 + $0x88] sm:$0xff]
        %v405 = vld [vmem:[%s1 + $0x90] sm:$0xff]
        %v406 = vld [vmem:[%s1 + $0x98] sm:$0xff]
        %v407 = vld [vmem:[%s1 + $0xa0] sm:$0xff]
        %v408 = vld [vmem:[%s1 + $0xa8] sm:$0xff]
        %v409 = vld [vmem:[%s1 + $0xb0] sm:$0xff]
        %v410 = vld [vmem:[%s1 + $0xb8] sm:$0xff]
        %v411 = vld [vmem:[%s1 + $0xc0] sm:$0xff]
        %v412 = vld [vmem:[%s1 + $0xc8] sm:$0xff]
        %v413 = vld [vmem:[%s1 + $0xd0] sm:$0xff]
        %v414 = vld [vmem:[%s1 + $0xd8] sm:$0xff]
        %v415 = vld [vmem:[%s1 + $0xe0] sm:$0xff]
        %v416 = vld [vmem:[%s1 + $0xe8] sm:$0xff]
        %v417 = vld [vmem:[%s1 + $0xf0] sm:$0xff]
        %v418 = vld [vmem:[%s1 + $0xf8] sm:$0xff]
        %v419 = vld [vmem:[%s1 + $0x100] sm:$0xff]
        %v420 = vld [vmem:[%s1 + $0x108] sm:$0xff]
        %v421 = vld [vmem:[%s1 + $0x110] sm:$0xff]
        %v422 = vld [vmem:[%s1 + $0x118] sm:$0xff]
        %v423 = vld [vmem:[%s1 + $0x120] sm:$0xff]
        %v424 = vld [vmem:[%s1 + $0x128] sm:$0xff]
        %v425 = vld [vmem:[%s1 + $0x130] sm:$0xff]
        %v426 = vld [vmem:[%s1 + $0x138] sm:$0xff]
        %v427 = vld [vmem:[%s2] sm:$0x1]
        %v428 = vrot.slane %v385, 6
        %v429 = vrot.slane %v386, 6
        %vm430 = vcmp.lt.s32.totalorder %v335, 2
        %v431 = vsel %vm430, %v428, %v429
        %v432 = vsel %vm430, %v429, %v428
        %v433 = vmul.f32 %v432, %v365
        %v434 = vmul.f32 %v431, %v366
        %v435 = vrot.slane %v385, 7
        %v436 = vrot.slane %v386, 7
        %vm437 = vcmp.lt.s32.totalorder %v335, 1
        %v438 = vsel %vm437, %v435, %v436
        %v439 = vsel %vm437, %v436, %v435
        %v440 = vmul.f32 %v439, %v371
        %v441 = vmul.f32 %v438, %v372
        %v442 = vrot.slane %v385, 1
        %v443 = vrot.slane %v386, 1
        %vm444 = vcmp.lt.s32.totalorder %v335, 7
        %v445 = vsel %vm444, %v442, %v443
        %v446 = vsel %vm444, %v443, %v442
        %v447 = vmul.f32 %v445, %v377
        %v448 = vmul.f32 %v446, %v378
        %v449 = vrot.slane %v385, 2
        %v450 = vrot.slane %v386, 2
        %vm451 = vcmp.lt.s32.totalorder %v335, 6
        %v452 = vsel %vm451, %v449, %v450
        %v453 = vsel %vm451, %v450, %v449
        %v454 = vmul.f32 %v452, %v383
        %v455 = vmul.f32 %v453, %v384
        %458 = vrot.lane.b32.xlu0 %v440, 64
        %v459 = vpop.permute.xlu0 %458
        %460 = vrot.lane.b32.xlu0 %v441, 64
        %v461 = vpop.permute.xlu0 %460
        %466 = vrot.lane.b32.xlu0 %v447, 64
        %v467 = vpop.permute.xlu0 %466
        %468 = vrot.lane.b32.xlu0 %v448, 64
        %v469 = vpop.permute.xlu0 %468
        %vm472 = vcmask 523264
        %v473 = vsel %vm472, %v433, %v459
        %v474 = vsel %vm472, %v434, %v461
        %v475 = vsel %vm472, %v385, %v467
        %v476 = vsel %vm472, %v386, %v469
        %v478 = vlaneseq
        %v479 = vshrl.u32 %v478, 7
        %v480 = vsub.s32 0, %v479
        %v481 = vrot.slane %v427, %v480
        %v484 = vsel %vm472, %v454, 0
        %v487 = vsel %vm472, %v455, 0
        %489 = vmatprep.subr.mxu0 0.0
        %490 = vmatpush1.msra.mxu0 %v387
        %491 = vmatprep.subr.mxu0 0.0
        %492 = vmatpush1.msra.mxu0 %v388
        %493 = vmatprep.subr.mxu0 0.0
        %494 = vmatpush1.msra.mxu0 %v389
        %495 = vmatprep.subr.mxu0 0.0
        %496 = vmatpush1.msra.mxu0 %v390
        %497 = vmatprep.subr.mxu0 0.0
        %498 = vmatpush1.msra.mxu0 %v391
        %499 = vmatprep.subr.mxu0 0.0
        %500 = vmatpush1.msra.mxu0 %v392
        %501 = vmatprep.subr.mxu0 0.0
        %502 = vmatpush1.msra.mxu0 %v393
        %503 = vmatprep.subr.mxu0 0.0
        %504 = vmatpush1.msra.mxu0 %v394
        %505 = vmatprep.subr.mxu0 0.0
        %506 = vmatpush1.msra.mxu0 %v395
        %507 = vmatprep.subr.mxu0 0.0
        %508 = vmatpush1.msra.mxu0 %v396
        %509 = vmatprep.subr.mxu0 0.0
        %510 = vmatpush1.msra.mxu0 %v397
        %511 = vmatprep.subr.mxu0 0.0
        %512 = vmatpush1.msra.mxu0 %v398
        %513 = vmatprep.subr.mxu0 0.0
        %514 = vmatpush1.msra.mxu0 %v399
        %515 = vmatprep.subr.mxu0 0.0
        %516 = vmatpush1.msra.mxu0 %v400
        %517 = vmatprep.subr.mxu0 0.0
        %518 = vmatpush1.msra.mxu0 %v401
        %519 = vmatprep.subr.mxu0 0.0
        %520 = vmatpush1.msra.mxu0 %v402
        %521 = vmatprep.subr.mxu0 0.0
        %522 = vmatpush1.msra.mxu0 %v403
        %523 = vmatprep.subr.mxu0 0.0
        %524 = vmatpush1.msra.mxu0 %v404
        %525 = vmatprep.subr.mxu0 0.0
        %526 = vmatpush1.msra.mxu0 %v405
        %527 = vmatprep.subr.mxu0 0.0
        %528 = vmatpush1.msra.mxu0 %v406
        %529 = vmatprep.subr.mxu0 0.0
        %530 = vmatpush1.msra.mxu0 %v407
        %531 = vmatprep.subr.mxu0 0.0
        %532 = vmatpush1.msra.mxu0 %v408
        %533 = vmatprep.subr.mxu0 0.0
        %534 = vmatpush1.msra.mxu0 %v409
        %535 = vmatprep.subr.mxu0 0.0
        %536 = vmatpush1.msra.mxu0 %v410
        %537 = vmatprep.subr.mxu0 0.0
        %538 = vmatpush1.msra.mxu0 %v411
        %539 = vmatprep.subr.mxu0 0.0
        %540 = vmatpush1.msra.mxu0 %v412
        %541 = vmatprep.subr.mxu0 0.0
        %542 = vmatpush1.msra.mxu0 %v413
        %543 = vmatprep.subr.mxu0 0.0
        %544 = vmatpush1.msra.mxu0 %v414
        %545 = vmatprep.subr.mxu0 0.0
        %546 = vmatpush1.msra.mxu0 %v415
        %547 = vmatprep.subr.mxu0 0.0
        %548 = vmatpush1.msra.mxu0 %v416
        %549 = vmatprep.subr.mxu0 0.0
        %550 = vmatpush1.msra.mxu0 %v417
        %551 = vmatprep.subr.mxu0 0.0
        %552 = vmatpush1.msra.mxu0 %v418
        %553 = vmatprep.mubr.f32.mxu0 %v475
        %554 = vmatmul.mubr.f32.gmra.mrb[0].mxu0 %v473
        %v555 = vpop.f32.mrb[0].mxu0
        %v556 = vadd.f32 %v481, %v555
        %v557 = vpop.f32.mrb[0].mxu0
        %558 = vmatprep.mubr.f32.mxu0 %v476
        %559 = vmatmul.mubr.f32.gmra.mrb[0].mxu0 %v474
        %v560 = vpop.f32.mrb[0].mxu0
        %v561 = vadd.f32 %v481, %v560
        %v562 = vpop.f32.mrb[0].mxu0
        %563 = vdwg.mxu0
        %564 = vmatprep.subr.mxu0 0.0
        %565 = vmatpush1.msra.mxu0 %v419
        %566 = vmatprep.subr.mxu0 0.0
        %567 = vmatpush1.msra.mxu0 %v420
        %568 = vmatprep.subr.mxu0 0.0
        %569 = vmatpush1.msra.mxu0 %v421
        %570 = vmatprep.subr.mxu0 0.0
        %571 = vmatpush1.msra.mxu0 %v422
        %572 = vmatprep.subr.mxu0 0.0
        %573 = vmatpush1.msra.mxu0 %v423
        %574 = vmatprep.subr.mxu0 0.0
        %575 = vmatpush1.msra.mxu0 %v424
        %576 = vmatprep.subr.mxu0 0.0
        %577 = vmatpush1.msra.mxu0 %v425
        %578 = vmatprep.subr.mxu0 0.0
        %579 = vmatpush1.msra.mxu0 %v426
        %580 = vmatprep.subr.mxu0 0.0
        %581 = vmatpush1.msra.mxu0 0.0
        %582 = vmatprep.subr.mxu0 0.0
        %583 = vmatpush1.msra.mxu0 0.0
        %584 = vmatprep.subr.mxu0 0.0
        %585 = vmatpush1.msra.mxu0 0.0
        %586 = vmatprep.subr.mxu0 0.0
        %587 = vmatpush1.msra.mxu0 0.0
        %588 = vmatprep.subr.mxu0 0.0
        %589 = vmatpush1.msra.mxu0 0.0
        %590 = vmatprep.subr.mxu0 0.0
        %591 = vmatpush1.msra.mxu0 0.0
        %592 = vmatprep.subr.mxu0 0.0
        %593 = vmatpush1.msra.mxu0 0.0
        %594 = vmatprep.subr.mxu0 0.0
        %595 = vmatpush1.msra.mxu0 0.0
        %596 = vmatprep.subr.mxu0 0.0
        %597 = vmatpush1.msra.mxu0 0.0
        %598 = vmatprep.subr.mxu0 0.0
        %599 = vmatpush1.msra.mxu0 0.0
        %600 = vmatprep.subr.mxu0 0.0
        %601 = vmatpush1.msra.mxu0 0.0
        %602 = vmatprep.subr.mxu0 0.0
        %603 = vmatpush1.msra.mxu0 0.0
        %604 = vmatprep.subr.mxu0 0.0
        %605 = vmatpush1.msra.mxu0 0.0
        %606 = vmatprep.subr.mxu0 0.0
        %607 = vmatpush1.msra.mxu0 0.0
        %608 = vmatprep.subr.mxu0 0.0
        %609 = vmatpush1.msra.mxu0 0.0
        %610 = vmatprep.subr.mxu0 0.0
        %611 = vmatpush1.msra.mxu0 0.0
        %612 = vmatprep.subr.mxu0 0.0
        %613 = vmatpush1.msra.mxu0 0.0
        %614 = vmatprep.subr.mxu0 0.0
        %615 = vmatpush1.msra.mxu0 0.0
        %616 = vmatprep.subr.mxu0 0.0
        %617 = vmatpush1.msra.mxu0 0.0
        %618 = vmatprep.subr.mxu0 0.0
        %619 = vmatpush1.msra.mxu0 0.0
        %620 = vmatprep.subr.mxu0 0.0
        %621 = vmatpush1.msra.mxu0 0.0
        %622 = vmatprep.subr.mxu0 0.0
        %623 = vmatpush1.msra.mxu0 0.0
        %624 = vmatprep.subr.mxu0 0.0
        %625 = vmatpush1.msra.mxu0 0.0
        %626 = vmatprep.subr.mxu0 0.0
        %627 = vmatpush1.msra.mxu0 0.0
        %628 = vmatprep.mubr.f32.mxu0 0.0
        %629 = vmatmul.mubr.f32.gmra.mrb[0].mxu0 %v484
        %v630 = vpop.f32.mrb[0].mxu0
        %v631 = vadd.f32 %v556, %v630
        %v632 = vpop.f32.mrb[0].mxu0
        %633 = vmatprep.mubr.f32.mxu0 0.0
        %634 = vmatmul.mubr.f32.gmra.mrb[0].mxu0 %v487
        %v635 = vpop.f32.mrb[0].mxu0
        %v636 = vadd.f32 %v561, %v635
        %v637 = vpop.f32.mrb[0].mxu0
        %638 = vdwg.mxu0
        %v639 = vmax.f32 %v631, 0.0
        %v640 = vmax.f32 %v636, 0.0
        %v641 = vld [vmem:[%s3] sm:$0xff]
        %v642 = vld [vmem:[%s3 + $0x8] sm:$0xff]
        %v643 = vld [vmem:[%s3 + $0x10] sm:$0xff]
        %v644 = vld [vmem:[%s3 + $0x18] sm:$0xff]
        %v645 = vld [vmem:[%s3 + $0x20] sm:$0xff]
        %v646 = vld [vmem:[%s3 + $0x28] sm:$0xff]
        %v647 = vld [vmem:[%s3 + $0x30] sm:$0xff]
        %v648 = vld [vmem:[%s3 + $0x38] sm:$0xff]
        %v649 = vld [vmem:[%s3 + $0x40] sm:$0xff]
        %v650 = vld [vmem:[%s3 + $0x48] sm:$0xff]
        %v651 = vld [vmem:[%s3 + $0x50] sm:$0xff]
        %v652 = vld [vmem:[%s3 + $0x58] sm:$0xff]
        %v653 = vld [vmem:[%s3 + $0x60] sm:$0xff]
        %v654 = vld [vmem:[%s3 + $0x68] sm:$0xff]
        %v655 = vld [vmem:[%s3 + $0x70] sm:$0xff]
        %v656 = vld [vmem:[%s3 + $0x78] sm:$0xff]
        %v657 = vld [vmem:[%s3 + $0x80] sm:$0xff]
        %v658 = vld [vmem:[%s3 + $0x88] sm:$0xff]
        %v659 = vld [vmem:[%s3 + $0x90] sm:$0xff]
        %v660 = vld [vmem:[%s3 + $0x98] sm:$0xff]
        %v661 = vld [vmem:[%s4] sm:$0x1]
        %v662 = vrot.slane %v639, 6
        %v663 = vrot.slane %v640, 6
        %v664 = vsel %vm430, %v662, %v663
        %v665 = vsel %vm430, %v663, %v662
        %v666 = vmul.f32 %v665, %v365
        %v667 = vmul.f32 %v664, %v366
        %v668 = vrot.slane %v639, 7
        %v669 = vrot.slane %v640, 7
        %v670 = vsel %vm437, %v668, %v669
        %v671 = vsel %vm437, %v669, %v668
        %v672 = vmul.f32 %v671, %v371
        %v673 = vmul.f32 %v670, %v372
        %v674 = vrot.slane %v639, 1
        %v675 = vrot.slane %v640, 1
        %v676 = vsel %vm444, %v674, %v675
        %v677 = vsel %vm444, %v675, %v674
        %v678 = vmul.f32 %v676, %v377
        %v679 = vmul.f32 %v677, %v378
        %v680 = vrot.slane %v639, 2
        %v681 = vrot.slane %v640, 2
        %v682 = vsel %vm451, %v680, %v681
        %v683 = vsel %vm451, %v681, %v680
        %v684 = vmul.f32 %v682, %v383
        %v685 = vmul.f32 %v683, %v384
        %688 = vrot.lane.b32.xlu0 %v672, 32
        %v689 = vpop.permute.xlu0 %688
        %690 = vrot.lane.b32.xlu0 %v673, 32
        %v691 = vpop.permute.xlu0 %690
        %696 = vrot.lane.b32.xlu0 %v639, 64
        %v697 = vpop.permute.xlu0 %696
        %698 = vrot.lane.b32.xlu0 %v640, 64
        %v699 = vpop.permute.xlu0 %698
        %704 = vrot.lane.b32.xlu0 %v678, 96
        %v705 = vpop.permute.xlu0 %704
        %706 = vrot.lane.b32.xlu0 %v679, 96
        %v707 = vpop.permute.xlu0 %706
        %vm710 = vcmask 261120
        %v711 = vsel %vm710, %v666, %v689
        %v712 = vsel %vm710, %v667, %v691
        %v713 = vsel %vm472, %v711, %v697
        %v714 = vsel %vm472, %v712, %v699
        %vm715 = vcmask 785408
        %v716 = vsel %vm715, %v713, %v705
        %v717 = vsel %vm715, %v714, %v707
        %v719 = vlaneseq
        %v720 = vshrl.u32 %v719, 7
        %v721 = vsub.s32 0, %v720
        %v722 = vrot.slane %v661, %v721
        %v725 = vsel %vm710, %v684, 0
        %v728 = vsel %vm710, %v685, 0
        %730 = vmatprep.subr.mxu0 0.0
        %731 = vmatpush1.msra.mxu0 %v641
        %732 = vmatprep.subr.mxu0 0.0
        %733 = vmatpush1.msra.mxu0 %v642
        %734 = vmatprep.subr.mxu0 0.0
        %735 = vmatpush1.msra.mxu0 %v643
        %736 = vmatprep.subr.mxu0 0.0
        %737 = vmatpush1.msra.mxu0 %v644
        %738 = vmatprep.subr.mxu0 0.0
        %739 = vmatpush1.msra.mxu0 %v645
        %740 = vmatprep.subr.mxu0 0.0
        %741 = vmatpush1.msra.mxu0 %v646
        %742 = vmatprep.subr.mxu0 0.0
        %743 = vmatpush1.msra.mxu0 %v647
        %744 = vmatprep.subr.mxu0 0.0
        %745 = vmatpush1.msra.mxu0 %v648
        %746 = vmatprep.subr.mxu0 0.0
        %747 = vmatpush1.msra.mxu0 %v649
        %748 = vmatprep.subr.mxu0 0.0
        %749 = vmatpush1.msra.mxu0 %v650
        %750 = vmatprep.subr.mxu0 0.0
        %751 = vmatpush1.msra.mxu0 %v651
        %752 = vmatprep.subr.mxu0 0.0
        %753 = vmatpush1.msra.mxu0 %v652
        %754 = vmatprep.subr.mxu0 0.0
        %755 = vmatpush1.msra.mxu0 %v653
        %756 = vmatprep.subr.mxu0 0.0
        %757 = vmatpush1.msra.mxu0 %v654
        %758 = vmatprep.subr.mxu0 0.0
        %759 = vmatpush1.msra.mxu0 %v655
        %760 = vmatprep.subr.mxu0 0.0
        %761 = vmatpush1.msra.mxu0 %v656
        %762 = vmatprep.subr.mxu0 0.0
        %763 = vmatpush1.msra.mxu0 %v657
        %764 = vmatprep.subr.mxu0 0.0
        %765 = vmatpush1.msra.mxu0 %v658
        %766 = vmatprep.subr.mxu0 0.0
        %767 = vmatpush1.msra.mxu0 %v659
        %768 = vmatprep.subr.mxu0 0.0
        %769 = vmatpush1.msra.mxu0 %v660
        %770 = vmatprep.subr.mxu0 0.0
        %771 = vmatpush1.msra.mxu0 0.0
        %772 = vmatprep.subr.mxu0 0.0
        %773 = vmatpush1.msra.mxu0 0.0
        %774 = vmatprep.subr.mxu0 0.0
        %775 = vmatpush1.msra.mxu0 0.0
        %776 = vmatprep.subr.mxu0 0.0
        %777 = vmatpush1.msra.mxu0 0.0
        %778 = vmatprep.subr.mxu0 0.0
        %779 = vmatpush1.msra.mxu0 0.0
        %780 = vmatprep.subr.mxu0 0.0
        %781 = vmatpush1.msra.mxu0 0.0
        %782 = vmatprep.subr.mxu0 0.0
        %783 = vmatpush1.msra.mxu0 0.0
        %784 = vmatprep.subr.mxu0 0.0
        %785 = vmatpush1.msra.mxu0 0.0
        %786 = vmatprep.subr.mxu0 0.0
        %787 = vmatpush1.msra.mxu0 0.0
        %788 = vmatprep.subr.mxu0 0.0
        %789 = vmatpush1.msra.mxu0 0.0
        %790 = vmatprep.subr.mxu0 0.0
        %791 = vmatpush1.msra.mxu0 0.0
        %792 = vmatprep.subr.mxu0 0.0
        %793 = vmatpush1.msra.mxu0 0.0
        %794 = vmatprep.mubr.f32.mxu0 %v725
        %795 = vmatmul.mubr.f32.gmra.mrb[0].mxu0 %v716
        %v796 = vpop.f32.mrb[0].mxu0
        %v797 = vadd.f32 %v722, %v796
        %v798 = vpop.f32.mrb[0].mxu0
        %799 = vmatprep.mubr.f32.mxu0 %v728
        %800 = vmatmul.mubr.f32.gmra.mrb[0].mxu0 %v717
        %v801 = vpop.f32.mrb[0].mxu0
        %v802 = vadd.f32 %v722, %v801
        %v803 = vpop.f32.mrb[0].mxu0
        %804 = vdwg.mxu0
        %v805 = vmax.f32 %v797, 0.0
        %v806 = vmax.f32 %v802, 0.0
        %v807 = vld [vmem:[%s5] sm:$0xff]
        %v808 = vld [vmem:[%s5 + $0x8] sm:$0xff]
        %v809 = vld [vmem:[%s5 + $0x10] sm:$0xff]
        %v810 = vld [vmem:[%s5 + $0x18] sm:$0xff]
        %v811 = vld [vmem:[%s5 + $0x20] sm:$0xff]
        %v812 = vld [vmem:[%s5 + $0x28] sm:$0xff]
        %v813 = vld [vmem:[%s5 + $0x30] sm:$0xff]
        %v814 = vld [vmem:[%s5 + $0x38] sm:$0xff]
        %v815 = vld [vmem:[%s5 + $0x40] sm:$0xff]
        %v816 = vld [vmem:[%s5 + $0x48] sm:$0xff]
        %v817 = vld [vmem:[%s5 + $0x50] sm:$0xff]
        %v818 = vld [vmem:[%s5 + $0x58] sm:$0xff]
        %v819 = vld [vmem:[%s5 + $0x60] sm:$0xff]
        %v820 = vld [vmem:[%s5 + $0x68] sm:$0xff]
        %v821 = vld [vmem:[%s5 + $0x70] sm:$0xff]
        %v822 = vld [vmem:[%s5 + $0x78] sm:$0xff]
        %v823 = vld [vmem:[%s5 + $0x80] sm:$0xff]
        %v824 = vld [vmem:[%s5 + $0x88] sm:$0xff]
        %v825 = vld [vmem:[%s5 + $0x90] sm:$0xff]
        %v826 = vld [vmem:[%s5 + $0x98] sm:$0xff]
        %v827 = vld [vmem:[%s6] sm:$0x1]
        %v828 = vrot.slane %v805, 6
        %v829 = vrot.slane %v806, 6
        %v830 = vsel %vm430, %v828, %v829
        %v831 = vsel %vm430, %v829, %v828
        %v832 = vmul.f32 %v831, %v365
        %v833 = vmul.f32 %v830, %v366
        %v834 = vrot.slane %v805, 7
        %v835 = vrot.slane %v806, 7
        %v836 = vsel %vm437, %v834, %v835
        %v837 = vsel %vm437, %v835, %v834
        %v838 = vmul.f32 %v837, %v371
        %v839 = vmul.f32 %v836, %v372
        %v840 = vrot.slane %v805, 1
        %v841 = vrot.slane %v806, 1
        %v842 = vsel %vm444, %v840, %v841
        %v843 = vsel %vm444, %v841, %v840
        %v844 = vmul.f32 %v842, %v377
        %v845 = vmul.f32 %v843, %v378
        %v846 = vrot.slane %v805, 2
        %v847 = vrot.slane %v806, 2
        %v848 = vsel %vm451, %v846, %v847
        %v849 = vsel %vm451, %v847, %v846
        %v850 = vmul.f32 %v848, %v383
        %v851 = vmul.f32 %v849, %v384
        %854 = vrot.lane.b32.xlu0 %v838, 32
        %v855 = vpop.permute.xlu0 %854
        %856 = vrot.lane.b32.xlu0 %v839, 32
        %v857 = vpop.permute.xlu0 %856
        %862 = vrot.lane.b32.xlu0 %v805, 64
        %v863 = vpop.permute.xlu0 %862
        %864 = vrot.lane.b32.xlu0 %v806, 64
        %v865 = vpop.permute.xlu0 %864
        %870 = vrot.lane.b32.xlu0 %v844, 96
        %v871 = vpop.permute.xlu0 %870
        %872 = vrot.lane.b32.xlu0 %v845, 96
        %v873 = vpop.permute.xlu0 %872
        %v876 = vsel %vm710, %v832, %v855
        %v877 = vsel %vm710, %v833, %v857
        %v878 = vsel %vm472, %v876, %v863
        %v879 = vsel %vm472, %v877, %v865
        %v880 = vsel %vm715, %v878, %v871
        %v881 = vsel %vm715, %v879, %v873
        %v883 = vlaneseq
        %v884 = vshrl.u32 %v883, 7
        %v885 = vsub.s32 0, %v884
        %v886 = vrot.slane %v827, %v885
        %v889 = vsel %vm710, %v850, 0
        %v892 = vsel %vm710, %v851, 0
        %894 = vmatprep.subr.mxu0 0.0
        %895 = vmatpush1.msra.mxu0 %v807
        %896 = vmatprep.subr.mxu0 0.0
        %897 = vmatpush1.msra.mxu0 %v808
        %898 = vmatprep.subr.mxu0 0.0
        %899 = vmatpush1.msra.mxu0 %v809
        %900 = vmatprep.subr.mxu0 0.0
        %901 = vmatpush1.msra.mxu0 %v810
        %902 = vmatprep.subr.mxu0 0.0
        %903 = vmatpush1.msra.mxu0 %v811
        %904 = vmatprep.subr.mxu0 0.0
        %905 = vmatpush1.msra.mxu0 %v812
        %906 = vmatprep.subr.mxu0 0.0
        %907 = vmatpush1.msra.mxu0 %v813
        %908 = vmatprep.subr.mxu0 0.0
        %909 = vmatpush1.msra.mxu0 %v814
        %910 = vmatprep.subr.mxu0 0.0
        %911 = vmatpush1.msra.mxu0 %v815
        %912 = vmatprep.subr.mxu0 0.0
        %913 = vmatpush1.msra.mxu0 %v816
        %914 = vmatprep.subr.mxu0 0.0
        %915 = vmatpush1.msra.mxu0 %v817
        %916 = vmatprep.subr.mxu0 0.0
        %917 = vmatpush1.msra.mxu0 %v818
        %918 = vmatprep.subr.mxu0 0.0
        %919 = vmatpush1.msra.mxu0 %v819
        %920 = vmatprep.subr.mxu0 0.0
        %921 = vmatpush1.msra.mxu0 %v820
        %922 = vmatprep.subr.mxu0 0.0
        %923 = vmatpush1.msra.mxu0 %v821
        %924 = vmatprep.subr.mxu0 0.0
        %925 = vmatpush1.msra.mxu0 %v822
        %926 = vmatprep.subr.mxu0 0.0
        %927 = vmatpush1.msra.mxu0 %v823
        %928 = vmatprep.subr.mxu0 0.0
        %929 = vmatpush1.msra.mxu0 %v824
        %930 = vmatprep.subr.mxu0 0.0
        %931 = vmatpush1.msra.mxu0 %v825
        %932 = vmatprep.subr.mxu0 0.0
        %933 = vmatpush1.msra.mxu0 %v826
        %934 = vmatprep.subr.mxu0 0.0
        %935 = vmatpush1.msra.mxu0 0.0
        %936 = vmatprep.subr.mxu0 0.0
        %937 = vmatpush1.msra.mxu0 0.0
        %938 = vmatprep.subr.mxu0 0.0
        %939 = vmatpush1.msra.mxu0 0.0
        %940 = vmatprep.subr.mxu0 0.0
        %941 = vmatpush1.msra.mxu0 0.0
        %942 = vmatprep.subr.mxu0 0.0
        %943 = vmatpush1.msra.mxu0 0.0
        %944 = vmatprep.subr.mxu0 0.0
        %945 = vmatpush1.msra.mxu0 0.0
        %946 = vmatprep.subr.mxu0 0.0
        %947 = vmatpush1.msra.mxu0 0.0
        %948 = vmatprep.subr.mxu0 0.0
        %949 = vmatpush1.msra.mxu0 0.0
        %950 = vmatprep.subr.mxu0 0.0
        %951 = vmatpush1.msra.mxu0 0.0
        %952 = vmatprep.subr.mxu0 0.0
        %953 = vmatpush1.msra.mxu0 0.0
        %954 = vmatprep.subr.mxu0 0.0
        %955 = vmatpush1.msra.mxu0 0.0
        %956 = vmatprep.subr.mxu0 0.0
        %957 = vmatpush1.msra.mxu0 0.0
        %958 = vmatprep.mubr.f32.mxu0 %v889
        %959 = vmatmul.mubr.f32.gmra.mrb[0].mxu0 %v880
        %v960 = vpop.f32.mrb[0].mxu0
        %v961 = vadd.f32 %v886, %v960
        %v962 = vpop.f32.mrb[0].mxu0
        %963 = vmatprep.mubr.f32.mxu0 %v892
        %964 = vmatmul.mubr.f32.gmra.mrb[0].mxu0 %v881
        %v965 = vpop.f32.mrb[0].mxu0
        %v966 = vadd.f32 %v886, %v965
        %v967 = vpop.f32.mrb[0].mxu0
        %968 = vdwg.mxu0
        %v969 = vmax.f32 %v961, 0.0
        %v970 = vmax.f32 %v966, 0.0
        %v971 = vld [vmem:[%s7] sm:$0xff]
        %v972 = vld [vmem:[%s7 + $0x8] sm:$0xff]
        %v973 = vld [vmem:[%s7 + $0x10] sm:$0xff]
        %v974 = vld [vmem:[%s7 + $0x18] sm:$0xff]
        %v975 = vld [vmem:[%s7 + $0x20] sm:$0xff]
        %v976 = vld [vmem:[%s7 + $0x28] sm:$0xff]
        %v977 = vld [vmem:[%s7 + $0x30] sm:$0xff]
        %v978 = vld [vmem:[%s7 + $0x38] sm:$0xff]
        %v979 = vld [vmem:[%s7 + $0x40] sm:$0xff]
        %v980 = vld [vmem:[%s7 + $0x48] sm:$0xff]
        %v981 = vld [vmem:[%s7 + $0x50] sm:$0xff]
        %v982 = vld [vmem:[%s7 + $0x58] sm:$0xff]
        %v983 = vld [vmem:[%s7 + $0x60] sm:$0xff]
        %v984 = vld [vmem:[%s7 + $0x68] sm:$0xff]
        %v985 = vld [vmem:[%s7 + $0x70] sm:$0xff]
        %v986 = vld [vmem:[%s7 + $0x78] sm:$0xff]
        %v987 = vld [vmem:[%s7 + $0x80] sm:$0xff]
        %v988 = vld [vmem:[%s7 + $0x88] sm:$0xff]
        %v989 = vld [vmem:[%s7 + $0x90] sm:$0xff]
        %v990 = vld [vmem:[%s7 + $0x98] sm:$0xff]
        %v991 = vld [vmem:[%s8] sm:$0x1]
        %v992 = vrot.slane %v969, 6
        %v993 = vrot.slane %v970, 6
        %v994 = vsel %vm430, %v992, %v993
        %v995 = vsel %vm430, %v993, %v992
        %v996 = vmul.f32 %v995, %v365
        %v997 = vmul.f32 %v994, %v366
        %v998 = vrot.slane %v969, 7
        %v999 = vrot.slane %v970, 7
        %v1000 = vsel %vm437, %v998, %v999
        %v1001 = vsel %vm437, %v999, %v998
        %v1002 = vmul.f32 %v1001, %v371
        %v1003 = vmul.f32 %v1000, %v372
        %v1004 = vrot.slane %v969, 1
        %v1005 = vrot.slane %v970, 1
        %v1006 = vsel %vm444, %v1004, %v1005
        %v1007 = vsel %vm444, %v1005, %v1004
        %v1008 = vmul.f32 %v1006, %v377
        %v1009 = vmul.f32 %v1007, %v378
        %v1010 = vrot.slane %v969, 2
        %v1011 = vrot.slane %v970, 2
        %v1012 = vsel %vm451, %v1010, %v1011
        %v1013 = vsel %vm451, %v1011, %v1010
        %v1014 = vmul.f32 %v1012, %v383
        %v1015 = vmul.f32 %v1013, %v384
        %1018 = vrot.lane.b32.xlu0 %v1002, 32
        %v1019 = vpop.permute.xlu0 %1018
        %1020 = vrot.lane.b32.xlu0 %v1003, 32
        %v1021 = vpop.permute.xlu0 %1020
        %1026 = vrot.lane.b32.xlu0 %v969, 64
        %v1027 = vpop.permute.xlu0 %1026
        %1028 = vrot.lane.b32.xlu0 %v970, 64
        %v1029 = vpop.permute.xlu0 %1028
        %1034 = vrot.lane.b32.xlu0 %v1008, 96
        %v1035 = vpop.permute.xlu0 %1034
        %1036 = vrot.lane.b32.xlu0 %v1009, 96
        %v1037 = vpop.permute.xlu0 %1036
        %v1040 = vsel %vm710, %v996, %v1019
        %v1041 = vsel %vm710, %v997, %v1021
        %v1042 = vsel %vm472, %v1040, %v1027
        %v1043 = vsel %vm472, %v1041, %v1029
        %v1044 = vsel %vm715, %v1042, %v1035
        %v1045 = vsel %vm715, %v1043, %v1037
        %v1047 = vlaneseq
        %v1048 = vshrl.u32 %v1047, 7
        %v1049 = vsub.s32 0, %v1048
        %v1050 = vrot.slane %v991, %v1049
        %v1053 = vsel %vm710, %v1014, 0
        %v1056 = vsel %vm710, %v1015, 0
        %1058 = vmatprep.subr.mxu0 0.0
        %1059 = vmatpush1.msra.mxu0 %v971
        %1060 = vmatprep.subr.mxu0 0.0
        %1061 = vmatpush1.msra.mxu0 %v972
        %1062 = vmatprep.subr.mxu0 0.0
        %1063 = vmatpush1.msra.mxu0 %v973
        %1064 = vmatprep.subr.mxu0 0.0
        %1065 = vmatpush1.msra.mxu0 %v974
        %1066 = vmatprep.subr.mxu0 0.0
        %1067 = vmatpush1.msra.mxu0 %v975
        %1068 = vmatprep.subr.mxu0 0.0
        %1069 = vmatpush1.msra.mxu0 %v976
        %1070 = vmatprep.subr.mxu0 0.0
        %1071 = vmatpush1.msra.mxu0 %v977
        %1072 = vmatprep.subr.mxu0 0.0
        %1073 = vmatpush1.msra.mxu0 %v978
        %1074 = vmatprep.subr.mxu0 0.0
        %1075 = vmatpush1.msra.mxu0 %v979
        %1076 = vmatprep.subr.mxu0 0.0
        %1077 = vmatpush1.msra.mxu0 %v980
        %1078 = vmatprep.subr.mxu0 0.0
        %1079 = vmatpush1.msra.mxu0 %v981
        %1080 = vmatprep.subr.mxu0 0.0
        %1081 = vmatpush1.msra.mxu0 %v982
        %1082 = vmatprep.subr.mxu0 0.0
        %1083 = vmatpush1.msra.mxu0 %v983
        %1084 = vmatprep.subr.mxu0 0.0
        %1085 = vmatpush1.msra.mxu0 %v984
        %1086 = vmatprep.subr.mxu0 0.0
        %1087 = vmatpush1.msra.mxu0 %v985
        %1088 = vmatprep.subr.mxu0 0.0
        %1089 = vmatpush1.msra.mxu0 %v986
        %1090 = vmatprep.subr.mxu0 0.0
        %1091 = vmatpush1.msra.mxu0 %v987
        %1092 = vmatprep.subr.mxu0 0.0
        %1093 = vmatpush1.msra.mxu0 %v988
        %1094 = vmatprep.subr.mxu0 0.0
        %1095 = vmatpush1.msra.mxu0 %v989
        %1096 = vmatprep.subr.mxu0 0.0
        %1097 = vmatpush1.msra.mxu0 %v990
        %1098 = vmatprep.subr.mxu0 0.0
        %1099 = vmatpush1.msra.mxu0 0.0
        %1100 = vmatprep.subr.mxu0 0.0
        %1101 = vmatpush1.msra.mxu0 0.0
        %1102 = vmatprep.subr.mxu0 0.0
        %1103 = vmatpush1.msra.mxu0 0.0
        %1104 = vmatprep.subr.mxu0 0.0
        %1105 = vmatpush1.msra.mxu0 0.0
        %1106 = vmatprep.subr.mxu0 0.0
        %1107 = vmatpush1.msra.mxu0 0.0
        %1108 = vmatprep.subr.mxu0 0.0
        %1109 = vmatpush1.msra.mxu0 0.0
        %1110 = vmatprep.subr.mxu0 0.0
        %1111 = vmatpush1.msra.mxu0 0.0
        %1112 = vmatprep.subr.mxu0 0.0
        %1113 = vmatpush1.msra.mxu0 0.0
        %1114 = vmatprep.subr.mxu0 0.0
        %1115 = vmatpush1.msra.mxu0 0.0
        %1116 = vmatprep.subr.mxu0 0.0
        %1117 = vmatpush1.msra.mxu0 0.0
        %1118 = vmatprep.subr.mxu0 0.0
        %1119 = vmatpush1.msra.mxu0 0.0
        %1120 = vmatprep.subr.mxu0 0.0
        %1121 = vmatpush1.msra.mxu0 0.0
        %1122 = vmatprep.mubr.f32.mxu0 %v1053
        %1123 = vmatmul.mubr.f32.gmra.mrb[0].mxu0 %v1044
        %v1124 = vpop.f32.mrb[0].mxu0
        %v1125 = vadd.f32 %v1050, %v1124
        %v1126 = vpop.f32.mrb[0].mxu0
        %1127 = vmatprep.mubr.f32.mxu0 %v1056
        %1128 = vmatmul.mubr.f32.gmra.mrb[0].mxu0 %v1045
        %v1129 = vpop.f32.mrb[0].mxu0
        %v1130 = vadd.f32 %v1050, %v1129
        %v1131 = vpop.f32.mrb[0].mxu0
        %1132 = vdwg.mxu0
        %v1133 = vadd.f32 %v1125, %v805
        %v1134 = vadd.f32 %v1130, %v806
        %v1135 = vmax.f32 %v1133, 0.0
        %v1136 = vmax.f32 %v1134, 0.0
        %1137 = vst.msk [vmem:[%s326] sm:$0xff] %vm710, %v1135
        %1138 = vst.msk [vmem:[%s326 + $0x8] sm:$0xff] %vm710, %v1136
        %s1139 = sand.u32 %s225, 1
        %s1140 = scalar_lea.sflag [#allocation3], %s1139
        %s1141 = sand.u32 %s225, 1
        %s1142 = smul.addr %s1141, 16
        %s1143 = scalar_lea.vmem [#allocation2], %s1142
        // Predicated region
        $region57: #{tpu_custom_call.1} parent=55 // pred_check
          %p1144 = pneg %p235
        $region58: #{tpu_custom_call.1} parent=55 // pred_check_branch
          %1146 = sbr.rel (%p1144) target = $region60
        $region59: #{tpu_custom_call.1} parent=55 // pred_region
          %s1147 = smul.u32 2, %s23
          %s1149 = ssub.s32 256, 256
          %1150 = vsyncadd %s1140, %s1149
          %s1151 = smul.addr %s1147, 128
          %s1152 = scalar_lea.hbm %s9, %s1151
          %s1153 = sshll.u32 %s1143, 4
          %s1154 = int_to_ptr.vmem [resolvable:$true] %s1153
          %1159 = dma.vmem_to_hbm [thread:$0]  %s1154, 256, %s1152, %s1140, 128, 128, 8
        $region60: #{tpu_custom_call.1} parent=55 // pred_fallthru
          _
      $region56: #{tpu_custom_call.1} parent=5 // pred_fallthru
        _
      %p1160 = scmp.le.s32.totalorder 2, %s18
      // Predicated region
      $region61: #{tpu_custom_call.1} parent=5 // pred_check
        %p1161 = pneg %p1160
      $region62: #{tpu_custom_call.1} parent=5 // pred_check_branch
        %1163 = sbr.rel (%p1161) target = $region64
      $region63: #{tpu_custom_call.1} parent=5 // pred_region
        %s1164 = ssub.s32 %s18, 2
        // Predicated region
        $region65: #{tpu_custom_call.1} parent=63 // pred_check
          %p1165 = pneg %p241
        $region66: #{tpu_custom_call.1} parent=63 // pred_check_branch
          %1167 = sbr.rel (%p1165) target = $region68
        $region67: #{tpu_custom_call.1} parent=63 // pred_region
          %s1168 = sand.u32 %s226, 1
          %s1169 = scalar_lea.sflag [#allocation3], %s1168
          %s1170 = sand.u32 %s226, 1
          %s1171 = smul.addr %s1170, 16
          %s1172 = scalar_lea.vmem [#allocation2], %s1171
          %1173 = dma.done %s1169, 256
        $region68: #{tpu_custom_call.1} parent=63 // pred_fallthru
          _
      $region64: #{tpu_custom_call.1} parent=5 // pred_fallthru
        _
    $region6: #{tpu_custom_call.1} parent=1 // loop_footer
      %s22 = sadd.s32 1, %s18
    $region7: #{tpu_custom_call.1} parent=1 // loop_footer_branch
      %17 = sbr.rel target = $region3
    $region8: #{tpu_custom_call.1} parent=1 // loop_exit
      _
    %1174 = vsyncpa [#allocation3], 1
    %s1175 = scalar_lea.sflag [#allocation3], 1
    %1176 = vsyncpa %s1175, 1

</llo_original>
